<compile_context>
chip_gen: v7x
topology: tpu7x:2x2x1
jax: 0.10.0
libtpu: 0.0.40
codegen_flags: <defaults>
</compile_context>

<pallas_src>
import functools

import numpy as np
import jax
import jax.numpy as jnp
from jax import lax
from jax.experimental import pallas as pl
from jax.experimental.pallas import tpu as pltpu

EPS = 1e-5  # nn.GroupNorm default


def _basic_block_kernel(x_ref, wb1_ref, g1_ref, b1_ref, wb2_ref, g2_ref,
                        b2_ref, sel_ref, selt_ref, o_ref, pad_scr,
                        *, NB, H, W, C, G):
    WC = W * C
    gs = C // G
    count = float(H * W * gs)

    x_dense = x_ref[...]                                  # (NB, H, WC) lane-dense

    # Zero only the two H-border rows of the padded scratch (every step: cheap
    # and correct when the batch grid is sharded across TensorCores).
    zrow = jnp.zeros((NB, 1, WC), jnp.float32)
    pad_scr[:, pl.ds(0, 1), :] = zrow
    pad_scr[:, pl.ds(H + 1, 1), :] = zrow

    def conv3x3(wb_ref):
        # Three full-width banded matmuls; W-boundary zeros live inside wb.
        acc = jnp.zeros((NB * H, WC), jnp.float32)
        for kh in range(3):
            xk = pad_scr[:, pl.ds(kh, H), :].reshape(NB * H, WC)
            acc = acc + jnp.dot(xk, wb_ref[kh],
                                preferred_element_type=jnp.float32)
        return acc.reshape(NB, H, WC)

    sel = sel_ref[...]                                    # (WC, G) one-hot reduce
    selt = selt_ref[...]                                  # (G, WC) one-hot expand

    def group_norm(y, gamma, beta):
        # Group reduce/expand as tiny MXU matmuls (MXU idle between convs).
        sum_h = jnp.sum(y, axis=1)                                       # (NB, WC)
        mean_g = jnp.dot(sum_h, sel, preferred_element_type=jnp.float32) / count
        mean = jnp.dot(mean_g, selt, preferred_element_type=jnp.float32)  # (NB, WC)
        d = y - mean[:, None, :]
        var_h = jnp.sum(d * d, axis=1)                                   # (NB, WC)
        var_g = jnp.dot(var_h, sel, preferred_element_type=jnp.float32) / count
        inv_g = lax.rsqrt(var_g + EPS)
        inv = jnp.dot(inv_g, selt, preferred_element_type=jnp.float32)   # (NB, WC)
        return d * inv[:, None, :] * gamma + beta

    # conv1 -> GroupNorm -> ReLU
    pad_scr[:, pl.ds(1, H), :] = x_dense
    y1 = conv3x3(wb1_ref)
    y1 = group_norm(y1, g1_ref[...], b1_ref[...])
    y1 = jnp.maximum(y1, 0.0)

    # conv2 -> GroupNorm (border rows of pad_scr are still zero).
    pad_scr[:, pl.ds(1, H), :] = y1
    y2 = conv3x3(wb2_ref)
    y2 = group_norm(y2, g2_ref[...], b2_ref[...])

    # Identity residual (downsample=None); lane-dense unmasked store.
    o_ref[...] = (y2 + x_dense).astype(o_ref.dtype)


def _banded_weights(w_oihw, W, C):
    """OIHW 3x3 conv weights -> 3 banded (W*C, W*C) matrices (one per kh).

    band[kh][w_in*C + ci, w_out*C + co] = w[co, ci, kh, w_in - w_out + 1]
    when |w_in - w_out| <= 1, else 0 (this encodes the W-dim zero padding).
    """
    w = jnp.asarray(w_oihw, jnp.float32)
    taps = jnp.transpose(w, (2, 3, 1, 0))                 # (kh, kw, Cin, Cout)
    w_in = jnp.arange(W)[:, None]
    w_out = jnp.arange(W)[None, :]
    kw = w_in - w_out + 1                                 # (W, W)
    valid = (kw >= 0) & (kw <= 2)
    band = taps[:, jnp.clip(kw, 0, 2)]                    # (kh, W, W, Cin, Cout)
    band = jnp.where(valid[None, :, :, None, None], band, 0.0)
    band = jnp.transpose(band, (0, 1, 3, 2, 4))           # (kh, W, Cin, W, Cout)
    return band.reshape(3, W * C, W * C)


def _group_select(W, C, G):
    """One-hot matrices mapping lanes (w*C + c) <-> GroupNorm groups."""
    lane_group = (jnp.arange(W * C) % C) // (C // G)      # (WC,)
    sel = (lane_group[:, None] == jnp.arange(G)[None, :]).astype(jnp.float32)
    return sel, sel.T                                     # (WC, G), (G, WC)


def _pick_nb(N, H, WC, budget_bytes=12 << 20):
    """Largest batch-block size whose VMEM footprint fits the budget,
    preferring >= 2 grid steps so v7x can shard the batch across its TCs."""
    best = 1
    for nb in range(1, min(N, 8) + 1):
        if N % nb:
            continue
        blocks = 2 * 2 * nb * H * WC * 4        # in + out blocks, double-buffered
        scratch = nb * (H + 2) * WC * 4
        if blocks + scratch > budget_bytes:
            continue
        if ((N // nb >= 2), nb) > ((N // best >= 2), best):
            best = nb
    return best


def basic_block_forward_dense(x_dense, params, *, H, W):
    """x_dense: (N, H, W*C) lane-dense NHWC activations.  Returns same layout.

    Keep activations in this layout across consecutive BasicBlocks to avoid
    per-block NCHW<->NHWC transposes in the wrapper.
    """
    N = x_dense.shape[0]
    C = params["w1"].shape[0]                 # planes
    assert params["w1"].shape[1] == C, "downsample=None requires inplanes == planes"
    assert C % 4 == 0
    G = C // 4                                # nn.GroupNorm(out_planes // 4, ...)
    WC = W * C
    assert x_dense.shape == (N, H, WC)

    wb1 = _banded_weights(params["w1"], W, C)
    wb2 = _banded_weights(params["w2"], W, C)
    sel, selt = _group_select(W, C, G)

    def tile_wc(v):                           # (C,) -> (1, W*C) per-lane affine
        return jnp.tile(jnp.asarray(v, jnp.float32).reshape(1, C), (1, W))

    g1, b1 = tile_wc(params["g1"]), tile_wc(params["b1"])
    g2, b2 = tile_wc(params["g2"]), tile_wc(params["b2"])

    NB = _pick_nb(N, H, WC)

    # Explicit VMEM limit derived from the per-step footprint (v7x has only
    # 64 MiB physical / 32 MiB default-scoped VMEM).
    weights_bytes = 2 * (2 * 3 * WC * WC * 4)              # both convs, dbl-buffered
    step_bytes = 2 * 2 * NB * H * WC * 4 + NB * (H + 2) * WC * 4 + weights_bytes
    vmem_limit = int(min(48 << 20, max(16 << 20, 4 * step_bytes)))

    kernel = functools.partial(_basic_block_kernel, NB=NB, H=H, W=W, C=C, G=G)

    return pl.pallas_call(
        kernel,
        out_shape=jax.ShapeDtypeStruct((N, H, WC), jnp.float32),
        grid_spec=pltpu.PrefetchScalarGridSpec(
            num_scalar_prefetch=0,
            grid=(N // NB,),
            in_specs=[
                pl.BlockSpec((NB, H, WC), lambda n: (n, 0, 0)),    # x (dense)
                pl.BlockSpec((3, WC, WC), lambda n: (0, 0, 0)),    # banded w1
                pl.BlockSpec((1, WC), lambda n: (0, 0)),           # gamma1
                pl.BlockSpec((1, WC), lambda n: (0, 0)),           # beta1
                pl.BlockSpec((3, WC, WC), lambda n: (0, 0, 0)),    # banded w2
                pl.BlockSpec((1, WC), lambda n: (0, 0)),           # gamma2
                pl.BlockSpec((1, WC), lambda n: (0, 0)),           # beta2
                pl.BlockSpec((WC, G), lambda n: (0, 0)),           # group reduce
                pl.BlockSpec((G, WC), lambda n: (0, 0)),           # group expand
            ],
            out_specs=pl.BlockSpec((NB, H, WC), lambda n: (n, 0, 0)),
            scratch_shapes=[pltpu.VMEM((NB, H + 2, WC), jnp.float32)],
        ),
        compiler_params=pltpu.CompilerParams(
            dimension_semantics=("parallel",),   # batch axis is independent
            vmem_limit_bytes=vmem_limit),
    )(x_dense, wb1, g1, b1, wb2, g2, b2, sel, selt)


def basic_block_forward(x_nchw, params):
    """NCHW interface matching the PyTorch module (one-off layout change)."""
    N, Cin, H, W = x_nchw.shape
    C = params["w1"].shape[0]
    assert Cin == C, "downsample=None requires inplanes == planes"
    x = jnp.transpose(x_nchw, (0, 2, 3, 1)).astype(jnp.float32).reshape(N, H, W * C)
    out = basic_block_forward_dense(x, params, H=H, W=W)
    return jnp.transpose(out.reshape(N, H, W, C), (0, 3, 1, 2))


def _reference_forward(x_nchw, params):
    """Plain-JAX reference with identical semantics, for a sanity check."""
    C = params["w1"].shape[0]
    G = C // 4
    x = jnp.transpose(x_nchw, (0, 2, 3, 1)).astype(jnp.float32)
    w1 = jnp.transpose(params["w1"], (2, 3, 1, 0)).astype(jnp.float32)
    w2 = jnp.transpose(params["w2"], (2, 3, 1, 0)).astype(jnp.float32)

    def conv(y, w):
        return lax.conv_general_dilated(
            y, w, (1, 1), [(1, 1), (1, 1)],
            dimension_numbers=("NHWC", "HWIO", "NHWC"))

    def gn(y, gamma, beta):
        N, H, W, Cc = y.shape
        gs = Cc // G
        yg = y.reshape(N, H, W, G, gs)
        mean = jnp.mean(yg, axis=(1, 2, 4), keepdims=True)
        var = jnp.mean((yg - mean) ** 2, axis=(1, 2, 4), keepdims=True)
        yn = ((yg - mean) / jnp.sqrt(var + EPS)).reshape(N, H, W, Cc)
        return yn * gamma.reshape(1, 1, 1, Cc) + beta.reshape(1, 1, 1, Cc)

    y = jax.nn.relu(gn(conv(x, w1), params["g1"], params["b1"]))
    y = gn(conv(y, w2), params["g2"], params["b2"])
    y = y + x
    return jnp.transpose(y, (0, 3, 1, 2))


if __name__ == "__main__":
    # BasicBlock(inplanes=8, planes=8, stride=1, downsample=None, pad=1, dilation=1)
    # W * C = 16 * 8 = 128 -> fully lane-dense blocks and full-width matmuls.
    N, Cin, H, W = 2, 8, 16, 16
    planes = 8

    key = jax.random.PRNGKey(0)
    k = jax.random.split(key, 7)
    x = jax.random.normal(k[0], (N, Cin, H, W), jnp.float32)

    params = {
        # conv weights stored PyTorch-style (O, I, kH, kW), no bias
        "w1": 0.1 * jax.random.normal(k[1], (planes, Cin, 3, 3), jnp.float32),
        "w2": 0.1 * jax.random.normal(k[2], (planes, planes, 3, 3), jnp.float32),
        # GroupNorm affine params (deterministic, non-trivial)
        "g1": 1.0 + 0.1 * jax.random.normal(k[3], (planes,), jnp.float32),
        "b1": 0.05 * jax.random.normal(k[4], (planes,), jnp.float32),
        "g2": 1.0 + 0.1 * jax.random.normal(k[5], (planes,), jnp.float32),
        "b2": 0.05 * jax.random.normal(k[6], (planes,), jnp.float32),
    }

    out = jax.block_until_ready(basic_block_forward(x, params))
    ref = jax.block_until_ready(_reference_forward(x, params))

    assert out.shape == (N, planes, H, W), out.shape
    np.testing.assert_allclose(np.asarray(out), np.asarray(ref),
                               rtol=1e-3, atol=1e-3)
    print("KERNEL_OK")
</pallas_src>

<mosaic_0001>
module attributes {stable_mosaic.version = 11 : i64} {
  func.func @_basic_block_kernel(%arg0: i32, %arg1: memref<1x16x128xf32, #tpu.memory_space<vmem>>, %arg2: memref<3x128x128xf32, #tpu.memory_space<vmem>>, %arg3: memref<1x128xf32, #tpu.memory_space<vmem>>, %arg4: memref<1x128xf32, #tpu.memory_space<vmem>>, %arg5: memref<3x128x128xf32, #tpu.memory_space<vmem>>, %arg6: memref<1x128xf32, #tpu.memory_space<vmem>>, %arg7: memref<1x128xf32, #tpu.memory_space<vmem>>, %arg8: memref<128x2xf32, #tpu.memory_space<vmem>>, %arg9: memref<2x128xf32, #tpu.memory_space<vmem>>, %arg10: memref<1x16x128xf32, #tpu.memory_space<vmem>>, %arg11: memref<1x18x128xf32, #tpu.memory_space<vmem>>) attributes {dimension_semantics = [#tpu.dimension_semantics<parallel>], iteration_bounds = array<i64: 2>, scalar_prefetch = 0 : i64, scratch_operands = 1 : i64, tpu.core_type = #tpu.core_type<tc>, window_params = [{transform_indices = @transform_0, window_bounds = array<i64: 1, 16, 128>}, {pipeline_mode = #tpu.pipeline_mode<synchronous>, transform_indices = @transform_1, window_bounds = array<i64: 3, 128, 128>}, {pipeline_mode = #tpu.pipeline_mode<synchronous>, transform_indices = @transform_2, window_bounds = array<i64: 1, 128>}, {pipeline_mode = #tpu.pipeline_mode<synchronous>, transform_indices = @transform_3, window_bounds = array<i64: 1, 128>}, {pipeline_mode = #tpu.pipeline_mode<synchronous>, transform_indices = @transform_4, window_bounds = array<i64: 3, 128, 128>}, {pipeline_mode = #tpu.pipeline_mode<synchronous>, transform_indices = @transform_5, window_bounds = array<i64: 1, 128>}, {pipeline_mode = #tpu.pipeline_mode<synchronous>, transform_indices = @transform_6, window_bounds = array<i64: 1, 128>}, {pipeline_mode = #tpu.pipeline_mode<synchronous>, transform_indices = @transform_7, window_bounds = array<i64: 128, 2>}, {pipeline_mode = #tpu.pipeline_mode<synchronous>, transform_indices = @transform_8, window_bounds = array<i64: 2, 128>}, {transform_indices = @transform_9, window_bounds = array<i64: 1, 16, 128>}]} {
    %c0 = arith.constant 0 : index
    %c0_0 = arith.constant 0 : index
    %c0_1 = arith.constant 0 : index
    %0 = vector.load %arg1[%c0, %c0_0, %c0_1] : memref<1x16x128xf32, #tpu.memory_space<vmem>>, vector<1x16x128xf32>
    %cst = arith.constant 0.000000e+00 : f32
    %1 = vector.broadcast %cst : f32 to vector<1x1x128xf32>
    %c0_2 = arith.constant 0 : index
    %c0_3 = arith.constant 0 : index
    %c0_4 = arith.constant 0 : index
    %2 = vector.load %arg11[%c0_2, %c0_3, %c0_4] : memref<1x18x128xf32, #tpu.memory_space<vmem>>, vector<1x1x128xf32>
    tpu.vector_store %arg11[%c0_2, %c0_3, %c0_4], %1 {strides = array<i32>} : memref<1x18x128xf32, #tpu.memory_space<vmem>>, vector<1x1x128xf32>,
    %c0_5 = arith.constant 0 : index
    %c17 = arith.constant 17 : index
    %c0_6 = arith.constant 0 : index
    %3 = vector.load %arg11[%c0_5, %c17, %c0_6] : memref<1x18x128xf32, #tpu.memory_space<vmem>>, vector<1x1x128xf32>
    tpu.vector_store %arg11[%c0_5, %c17, %c0_6], %1 {strides = array<i32>} : memref<1x18x128xf32, #tpu.memory_space<vmem>>, vector<1x1x128xf32>,
    %c0_7 = arith.constant 0 : index
    %c0_8 = arith.constant 0 : index
    %4 = vector.load %arg8[%c0_7, %c0_8] : memref<128x2xf32, #tpu.memory_space<vmem>>, vector<128x2xf32>
    %c0_9 = arith.constant 0 : index
    %c0_10 = arith.constant 0 : index
    %5 = vector.load %arg9[%c0_9, %c0_10] : memref<2x128xf32, #tpu.memory_space<vmem>>, vector<2x128xf32>
    %c0_11 = arith.constant 0 : index
    %c1 = arith.constant 1 : index
    %c0_12 = arith.constant 0 : index
    %6 = vector.load %arg11[%c0_11, %c1, %c0_12] : memref<1x18x128xf32, #tpu.memory_space<vmem>>, vector<1x16x128xf32>
    tpu.vector_store %arg11[%c0_11, %c1, %c0_12], %0 {strides = array<i32>} : memref<1x18x128xf32, #tpu.memory_space<vmem>>, vector<1x16x128xf32>,
    %cst_13 = arith.constant 0.000000e+00 : f32
    %7 = vector.broadcast %cst_13 : f32 to vector<16x128xf32>
    %c0_14 = arith.constant 0 : index
    %c0_15 = arith.constant 0 : index
    %c0_16 = arith.constant 0 : index
    %8 = vector.load %arg11[%c0_14, %c0_15, %c0_16] : memref<1x18x128xf32, #tpu.memory_space<vmem>>, vector<1x16x128xf32>
    %9 = vector.shape_cast %8 : vector<1x16x128xf32> to vector<16x128xf32>
    %c0_17 = arith.constant 0 : index
    %c0_18 = arith.constant 0 : index
    %c0_19 = arith.constant 0 : index
    %10 = vector.load %arg2[%c0_17, %c0_18, %c0_19] : memref<3x128x128xf32, #tpu.memory_space<vmem>>, vector<1x128x128xf32>
    %11 = vector.shape_cast %10 : vector<1x128x128xf32> to vector<128x128xf32>
    %cst_20 = arith.constant dense<0.000000e+00> : vector<16x128xf32>
    %12 = tpu.matmul %9, %11, %cst_20 {dimension_numbers = #tpu.dot_dimension_numbers<[1], [0], [0], [1], [0, 0, 1, 1], [], []>} : vector<16x128xf32>, vector<128x128xf32>, vector<16x128xf32> -> vector<16x128xf32>
    %13 = arith.addf %7, %12 : vector<16x128xf32>
    %c0_21 = arith.constant 0 : index
    %c1_22 = arith.constant 1 : index
    %c0_23 = arith.constant 0 : index
    %14 = vector.load %arg11[%c0_21, %c1_22, %c0_23] : memref<1x18x128xf32, #tpu.memory_space<vmem>>, vector<1x16x128xf32>
    %15 = vector.shape_cast %14 : vector<1x16x128xf32> to vector<16x128xf32>
    %c1_24 = arith.constant 1 : index
    %c0_25 = arith.constant 0 : index
    %c0_26 = arith.constant 0 : index
    %16 = vector.load %arg2[%c1_24, %c0_25, %c0_26] : memref<3x128x128xf32, #tpu.memory_space<vmem>>, vector<1x128x128xf32>
    %17 = vector.shape_cast %16 : vector<1x128x128xf32> to vector<128x128xf32>
    %cst_27 = arith.constant dense<0.000000e+00> : vector<16x128xf32>
    %18 = tpu.matmul %15, %17, %cst_27 {dimension_numbers = #tpu.dot_dimension_numbers<[1], [0], [0], [1], [0, 0, 1, 1], [], []>} : vector<16x128xf32>, vector<128x128xf32>, vector<16x128xf32> -> vector<16x128xf32>
    %19 = arith.addf %13, %18 : vector<16x128xf32>
    %c0_28 = arith.constant 0 : index
    %c2 = arith.constant 2 : index
    %c0_29 = arith.constant 0 : index
    %20 = vector.load %arg11[%c0_28, %c2, %c0_29] : memref<1x18x128xf32, #tpu.memory_space<vmem>>, vector<1x16x128xf32>
    %21 = vector.shape_cast %20 : vector<1x16x128xf32> to vector<16x128xf32>
    %c2_30 = arith.constant 2 : index
    %c0_31 = arith.constant 0 : index
    %c0_32 = arith.constant 0 : index
    %22 = vector.load %arg2[%c2_30, %c0_31, %c0_32] : memref<3x128x128xf32, #tpu.memory_space<vmem>>, vector<1x128x128xf32>
    %23 = vector.shape_cast %22 : vector<1x128x128xf32> to vector<128x128xf32>
    %cst_33 = arith.constant dense<0.000000e+00> : vector<16x128xf32>
    %24 = tpu.matmul %21, %23, %cst_33 {dimension_numbers = #tpu.dot_dimension_numbers<[1], [0], [0], [1], [0, 0, 1, 1], [], []>} : vector<16x128xf32>, vector<128x128xf32>, vector<16x128xf32> -> vector<16x128xf32>
    %25 = arith.addf %19, %24 : vector<16x128xf32>
    %26 = vector.shape_cast %25 : vector<16x128xf32> to vector<1x16x128xf32>
    %c0_34 = arith.constant 0 : index
    %c0_35 = arith.constant 0 : index
    %27 = vector.load %arg3[%c0_34, %c0_35] : memref<1x128xf32, #tpu.memory_space<vmem>>, vector<1x128xf32>
    %c0_36 = arith.constant 0 : index
    %c0_37 = arith.constant 0 : index
    %28 = vector.load %arg4[%c0_36, %c0_37] : memref<1x128xf32, #tpu.memory_space<vmem>>, vector<1x128xf32>
    %cst_38 = arith.constant dense<0.000000e+00> : vector<1x128xf32>
    %29 = vector.multi_reduction <add>, %26, %cst_38 [1] : vector<1x16x128xf32> to vector<1x128xf32>
    %cst_39 = arith.constant dense<0.000000e+00> : vector<1x2xf32>
    %30 = tpu.matmul %29, %4, %cst_39 {dimension_numbers = #tpu.dot_dimension_numbers<[1], [0], [0], [1], [0, 0, 1, 1], [], []>} : vector<1x128xf32>, vector<128x2xf32>, vector<1x2xf32> -> vector<1x2xf32>
    %cst_40 = arith.constant 1.024000e+03 : f32
    %31 = vector.broadcast %cst_40 : f32 to vector<1x2xf32>
    %32 = arith.divf %30, %31 : vector<1x2xf32>
    %cst_41 = arith.constant dense<0.000000e+00> : vector<1x128xf32>
    %33 = tpu.matmul %32, %5, %cst_41 {dimension_numbers = #tpu.dot_dimension_numbers<[1], [0], [0], [1], [0, 0, 1, 1], [], []>} : vector<1x2xf32>, vector<2x128xf32>, vector<1x128xf32> -> vector<1x128xf32>
    %34 = vector.shape_cast %33 : vector<1x128xf32> to vector<1x1x128xf32>
    %35 = vector.broadcast %34 : vector<1x1x128xf32> to vector<1x16x128xf32>
    %36 = arith.subf %26, %35 : vector<1x16x128xf32>
    %37 = arith.mulf %36, %36 : vector<1x16x128xf32>
    %cst_42 = arith.constant dense<0.000000e+00> : vector<1x128xf32>
    %38 = vector.multi_reduction <add>, %37, %cst_42 [1] : vector<1x16x128xf32> to vector<1x128xf32>
    %cst_43 = arith.constant dense<0.000000e+00> : vector<1x2xf32>
    %39 = tpu.matmul %38, %4, %cst_43 {dimension_numbers = #tpu.dot_dimension_numbers<[1], [0], [0], [1], [0, 0, 1, 1], [], []>} : vector<1x128xf32>, vector<128x2xf32>, vector<1x2xf32> -> vector<1x2xf32>
    %cst_44 = arith.constant 1.024000e+03 : f32
    %40 = vector.broadcast %cst_44 : f32 to vector<1x2xf32>
    %41 = arith.divf %39, %40 : vector<1x2xf32>
    %cst_45 = arith.constant 9.99999974E-6 : f32
    %42 = vector.broadcast %cst_45 : f32 to vector<1x2xf32>
    %43 = arith.addf %41, %42 : vector<1x2xf32>
    %44 = math.rsqrt %43 : vector<1x2xf32>
    %cst_46 = arith.constant dense<0.000000e+00> : vector<1x128xf32>
    %45 = tpu.matmul %44, %5, %cst_46 {dimension_numbers = #tpu.dot_dimension_numbers<[1], [0], [0], [1], [0, 0, 1, 1], [], []>} : vector<1x2xf32>, vector<2x128xf32>, vector<1x128xf32> -> vector<1x128xf32>
    %46 = vector.shape_cast %45 : vector<1x128xf32> to vector<1x1x128xf32>
    %47 = vector.broadcast %46 : vector<1x1x128xf32> to vector<1x16x128xf32>
    %48 = arith.mulf %36, %47 : vector<1x16x128xf32>
    %49 = vector.shape_cast %27 : vector<1x128xf32> to vector<1x1x128xf32>
    %50 = vector.broadcast %49 : vector<1x1x128xf32> to vector<1x16x128xf32>
    %51 = arith.mulf %48, %50 : vector<1x16x128xf32>
    %52 = vector.shape_cast %28 : vector<1x128xf32> to vector<1x1x128xf32>
    %53 = vector.broadcast %52 : vector<1x1x128xf32> to vector<1x16x128xf32>
    %54 = arith.addf %51, %53 : vector<1x16x128xf32>
    %cst_47 = arith.constant 0.000000e+00 : f32
    %55 = vector.broadcast %cst_47 : f32 to vector<1x16x128xf32>
    %56 = arith.maximumf %54, %55 : vector<1x16x128xf32>
    %c0_48 = arith.constant 0 : index
    %c1_49 = arith.constant 1 : index
    %c0_50 = arith.constant 0 : index
    %57 = vector.load %arg11[%c0_48, %c1_49, %c0_50] : memref<1x18x128xf32, #tpu.memory_space<vmem>>, vector<1x16x128xf32>
    tpu.vector_store %arg11[%c0_48, %c1_49, %c0_50], %56 {strides = array<i32>} : memref<1x18x128xf32, #tpu.memory_space<vmem>>, vector<1x16x128xf32>,
    %cst_51 = arith.constant 0.000000e+00 : f32
    %58 = vector.broadcast %cst_51 : f32 to vector<16x128xf32>
    %c0_52 = arith.constant 0 : index
    %c0_53 = arith.constant 0 : index
    %c0_54 = arith.constant 0 : index
    %59 = vector.load %arg11[%c0_52, %c0_53, %c0_54] : memref<1x18x128xf32, #tpu.memory_space<vmem>>, vector<1x16x128xf32>
    %60 = vector.shape_cast %59 : vector<1x16x128xf32> to vector<16x128xf32>
    %c0_55 = arith.constant 0 : index
    %c0_56 = arith.constant 0 : index
    %c0_57 = arith.constant 0 : index
    %61 = vector.load %arg5[%c0_55, %c0_56, %c0_57] : memref<3x128x128xf32, #tpu.memory_space<vmem>>, vector<1x128x128xf32>
    %62 = vector.shape_cast %61 : vector<1x128x128xf32> to vector<128x128xf32>
    %cst_58 = arith.constant dense<0.000000e+00> : vector<16x128xf32>
    %63 = tpu.matmul %60, %62, %cst_58 {dimension_numbers = #tpu.dot_dimension_numbers<[1], [0], [0], [1], [0, 0, 1, 1], [], []>} : vector<16x128xf32>, vector<128x128xf32>, vector<16x128xf32> -> vector<16x128xf32>
    %64 = arith.addf %58, %63 : vector<16x128xf32>
    %c0_59 = arith.constant 0 : index
    %c1_60 = arith.constant 1 : index
    %c0_61 = arith.constant 0 : index
    %65 = vector.load %arg11[%c0_59, %c1_60, %c0_61] : memref<1x18x128xf32, #tpu.memory_space<vmem>>, vector<1x16x128xf32>
    %66 = vector.shape_cast %65 : vector<1x16x128xf32> to vector<16x128xf32>
    %c1_62 = arith.constant 1 : index
    %c0_63 = arith.constant 0 : index
    %c0_64 = arith.constant 0 : index
    %67 = vector.load %arg5[%c1_62, %c0_63, %c0_64] : memref<3x128x128xf32, #tpu.memory_space<vmem>>, vector<1x128x128xf32>
    %68 = vector.shape_cast %67 : vector<1x128x128xf32> to vector<128x128xf32>
    %cst_65 = arith.constant dense<0.000000e+00> : vector<16x128xf32>
    %69 = tpu.matmul %66, %68, %cst_65 {dimension_numbers = #tpu.dot_dimension_numbers<[1], [0], [0], [1], [0, 0, 1, 1], [], []>} : vector<16x128xf32>, vector<128x128xf32>, vector<16x128xf32> -> vector<16x128xf32>
    %70 = arith.addf %64, %69 : vector<16x128xf32>
    %c0_66 = arith.constant 0 : index
    %c2_67 = arith.constant 2 : index
    %c0_68 = arith.constant 0 : index
    %71 = vector.load %arg11[%c0_66, %c2_67, %c0_68] : memref<1x18x128xf32, #tpu.memory_space<vmem>>, vector<1x16x128xf32>
    %72 = vector.shape_cast %71 : vector<1x16x128xf32> to vector<16x128xf32>
    %c2_69 = arith.constant 2 : index
    %c0_70 = arith.constant 0 : index
    %c0_71 = arith.constant 0 : index
    %73 = vector.load %arg5[%c2_69, %c0_70, %c0_71] : memref<3x128x128xf32, #tpu.memory_space<vmem>>, vector<1x128x128xf32>
    %74 = vector.shape_cast %73 : vector<1x128x128xf32> to vector<128x128xf32>
    %cst_72 = arith.constant dense<0.000000e+00> : vector<16x128xf32>
    %75 = tpu.matmul %72, %74, %cst_72 {dimension_numbers = #tpu.dot_dimension_numbers<[1], [0], [0], [1], [0, 0, 1, 1], [], []>} : vector<16x128xf32>, vector<128x128xf32>, vector<16x128xf32> -> vector<16x128xf32>
    %76 = arith.addf %70, %75 : vector<16x128xf32>
    %77 = vector.shape_cast %76 : vector<16x128xf32> to vector<1x16x128xf32>
    %c0_73 = arith.constant 0 : index
    %c0_74 = arith.constant 0 : index
    %78 = vector.load %arg6[%c0_73, %c0_74] : memref<1x128xf32, #tpu.memory_space<vmem>>, vector<1x128xf32>
    %c0_75 = arith.constant 0 : index
    %c0_76 = arith.constant 0 : index
    %79 = vector.load %arg7[%c0_75, %c0_76] : memref<1x128xf32, #tpu.memory_space<vmem>>, vector<1x128xf32>
    %cst_77 = arith.constant dense<0.000000e+00> : vector<1x128xf32>
    %80 = vector.multi_reduction <add>, %77, %cst_77 [1] : vector<1x16x128xf32> to vector<1x128xf32>
    %cst_78 = arith.constant dense<0.000000e+00> : vector<1x2xf32>
    %81 = tpu.matmul %80, %4, %cst_78 {dimension_numbers = #tpu.dot_dimension_numbers<[1], [0], [0], [1], [0, 0, 1, 1], [], []>} : vector<1x128xf32>, vector<128x2xf32>, vector<1x2xf32> -> vector<1x2xf32>
    %cst_79 = arith.constant 1.024000e+03 : f32
    %82 = vector.broadcast %cst_79 : f32 to vector<1x2xf32>
    %83 = arith.divf %81, %82 : vector<1x2xf32>
    %cst_80 = arith.constant dense<0.000000e+00> : vector<1x128xf32>
    %84 = tpu.matmul %83, %5, %cst_80 {dimension_numbers = #tpu.dot_dimension_numbers<[1], [0], [0], [1], [0, 0, 1, 1], [], []>} : vector<1x2xf32>, vector<2x128xf32>, vector<1x128xf32> -> vector<1x128xf32>
    %85 = vector.shape_cast %84 : vector<1x128xf32> to vector<1x1x128xf32>
    %86 = vector.broadcast %85 : vector<1x1x128xf32> to vector<1x16x128xf32>
    %87 = arith.subf %77, %86 : vector<1x16x128xf32>
    %88 = arith.mulf %87, %87 : vector<1x16x128xf32>
    %cst_81 = arith.constant dense<0.000000e+00> : vector<1x128xf32>
    %89 = vector.multi_reduction <add>, %88, %cst_81 [1] : vector<1x16x128xf32> to vector<1x128xf32>
    %cst_82 = arith.constant dense<0.000000e+00> : vector<1x2xf32>
    %90 = tpu.matmul %89, %4, %cst_82 {dimension_numbers = #tpu.dot_dimension_numbers<[1], [0], [0], [1], [0, 0, 1, 1], [], []>} : vector<1x128xf32>, vector<128x2xf32>, vector<1x2xf32> -> vector<1x2xf32>
    %cst_83 = arith.constant 1.024000e+03 : f32
    %91 = vector.broadcast %cst_83 : f32 to vector<1x2xf32>
    %92 = arith.divf %90, %91 : vector<1x2xf32>
    %cst_84 = arith.constant 9.99999974E-6 : f32
    %93 = vector.broadcast %cst_84 : f32 to vector<1x2xf32>
    %94 = arith.addf %92, %93 : vector<1x2xf32>
    %95 = math.rsqrt %94 : vector<1x2xf32>
    %cst_85 = arith.constant dense<0.000000e+00> : vector<1x128xf32>
    %96 = tpu.matmul %95, %5, %cst_85 {dimension_numbers = #tpu.dot_dimension_numbers<[1], [0], [0], [1], [0, 0, 1, 1], [], []>} : vector<1x2xf32>, vector<2x128xf32>, vector<1x128xf32> -> vector<1x128xf32>
    %97 = vector.shape_cast %96 : vector<1x128xf32> to vector<1x1x128xf32>
    %98 = vector.broadcast %97 : vector<1x1x128xf32> to vector<1x16x128xf32>
    %99 = arith.mulf %87, %98 : vector<1x16x128xf32>
    %100 = vector.shape_cast %78 : vector<1x128xf32> to vector<1x1x128xf32>
    %101 = vector.broadcast %100 : vector<1x1x128xf32> to vector<1x16x128xf32>
    %102 = arith.mulf %99, %101 : vector<1x16x128xf32>
    %103 = vector.shape_cast %79 : vector<1x128xf32> to vector<1x1x128xf32>
    %104 = vector.broadcast %103 : vector<1x1x128xf32> to vector<1x16x128xf32>
    %105 = arith.addf %102, %104 : vector<1x16x128xf32>
    %106 = arith.addf %105, %0 : vector<1x16x128xf32>
    %c0_86 = arith.constant 0 : index
    %c0_87 = arith.constant 0 : index
    %c0_88 = arith.constant 0 : index
    %107 = vector.load %arg10[%c0_86, %c0_87, %c0_88] : memref<1x16x128xf32, #tpu.memory_space<vmem>>, vector<1x16x128xf32>
    tpu.vector_store %arg10[%c0_86, %c0_87, %c0_88], %106 {strides = array<i32>} : memref<1x16x128xf32, #tpu.memory_space<vmem>>, vector<1x16x128xf32>,
    return
  }
  func.func @transform_0(%arg0: i32) -> (i32, i32, i32) {
    %c0_i32 = arith.constant 0 : i32
    %c0_i32_0 = arith.constant 0 : i32
    %c0_i32_1 = arith.constant 0 : i32
    return %arg0, %c0_i32, %c0_i32_0 : i32, i32, i32
  }
  func.func @transform_1(%arg0: i32) -> (i32, i32, i32) {
    %c0_i32 = arith.constant 0 : i32
    %c0_i32_0 = arith.constant 0 : i32
    %c0_i32_1 = arith.constant 0 : i32
    %c0_i32_2 = arith.constant 0 : i32
    return %c0_i32, %c0_i32_0, %c0_i32_1 : i32, i32, i32
  }
  func.func @transform_2(%arg0: i32) -> (i32, i32) {
    %c0_i32 = arith.constant 0 : i32
    %c0_i32_0 = arith.constant 0 : i32
    %c0_i32_1 = arith.constant 0 : i32
    return %c0_i32, %c0_i32_0 : i32, i32
  }
  func.func @transform_3(%arg0: i32) -> (i32, i32) {
    %c0_i32 = arith.constant 0 : i32
    %c0_i32_0 = arith.constant 0 : i32
    %c0_i32_1 = arith.constant 0 : i32
    return %c0_i32, %c0_i32_0 : i32, i32
  }
  func.func @transform_4(%arg0: i32) -> (i32, i32, i32) {
    %c0_i32 = arith.constant 0 : i32
    %c0_i32_0 = arith.constant 0 : i32
    %c0_i32_1 = arith.constant 0 : i32
    %c0_i32_2 = arith.constant 0 : i32
    return %c0_i32, %c0_i32_0, %c0_i32_1 : i32, i32, i32
  }
  func.func @transform_5(%arg0: i32) -> (i32, i32) {
    %c0_i32 = arith.constant 0 : i32
    %c0_i32_0 = arith.constant 0 : i32
    %c0_i32_1 = arith.constant 0 : i32
    return %c0_i32, %c0_i32_0 : i32, i32
  }
  func.func @transform_6(%arg0: i32) -> (i32, i32) {
    %c0_i32 = arith.constant 0 : i32
    %c0_i32_0 = arith.constant 0 : i32
    %c0_i32_1 = arith.constant 0 : i32
    return %c0_i32, %c0_i32_0 : i32, i32
  }
  func.func @transform_7(%arg0: i32) -> (i32, i32) {
    %c0_i32 = arith.constant 0 : i32
    %c0_i32_0 = arith.constant 0 : i32
    %c0_i32_1 = arith.constant 0 : i32
    return %c0_i32, %c0_i32_0 : i32, i32
  }
  func.func @transform_8(%arg0: i32) -> (i32, i32) {
    %c0_i32 = arith.constant 0 : i32
    %c0_i32_0 = arith.constant 0 : i32
    %c0_i32_1 = arith.constant 0 : i32
    return %c0_i32, %c0_i32_0 : i32, i32
  }
  func.func @transform_9(%arg0: i32) -> (i32, i32, i32) {
    %c0_i32 = arith.constant 0 : i32
    %c0_i32_0 = arith.constant 0 : i32
    %c0_i32_1 = arith.constant 0 : i32
    return %arg0, %c0_i32, %c0_i32_0 : i32, i32, i32
  }
}

</mosaic_0001>

<llo_original>
// kernel: tpu_custom_call.1
$region0: #{tpu_custom_call.1}
  #allocation0 [shape = 'u32[]', space=smem, size = 0x4, offset = 0x4, fixed_abs, tag = 'smem constant byte address 0x4 - core index']
  #allocation1 [shape = 'u32[144,128]{1,0:T(1,128)}', space=vmem, size = 0x12000, scoped, tag = 'internal scratch']
  #allocation2 [shape = 'f32[1,18,128]{2,1,0:T(8,128)}', space=vmem, size = 0x3000, scoped, tag = 'scratch operand']
  %s0 = inlined_call_operand.vmem [shape: f32[2,16,128], index: 0, kind: input, shape index: {}]
  %s1 = inlined_call_operand.hbm [shape: f32[3,128,128], index: 1, kind: input, shape index: {}]
  %s2 = inlined_call_operand.vmem [shape: f32[1,128], index: 2, kind: input, shape index: {}]
  %s3 = inlined_call_operand.vmem [shape: f32[1,128], index: 3, kind: input, shape index: {}]
  %s4 = inlined_call_operand.hbm [shape: f32[3,128,128], index: 4, kind: input, shape index: {}]
  %s5 = inlined_call_operand.vmem [shape: f32[1,128], index: 5, kind: input, shape index: {}]
  %s6 = inlined_call_operand.vmem [shape: f32[1,128], index: 6, kind: input, shape index: {}]
  %s7 = inlined_call_operand.vmem [shape: f32[128,2], index: 7, kind: input, shape index: {}]
  %s8 = inlined_call_operand.vmem [shape: f32[2,128], index: 8, kind: input, shape index: {}]
  %s9 = inlined_call_operand.hbm [shape: f32[2,16,128], index: 9, kind: output, shape index: {}]
  %s10 = sld [smem:[#allocation0]]
  $region77: #{tpu_custom_call.1} parent=0
    _
  %s12 = ssub.s32 1, %s10
  %s13 = scalar_select 0, %s12, %s10
  $region1: #{tpu_custom_call.1} parent=0
    #allocation3 [shape = 'u8[196608]{0}', space=vmem, size = 0x30000, scoped, tag = 'input window, operand 1, single buffered']
    #allocation4 [shape = 's32[2]{0}', space=sflag, size = 0x8, scoped, tag = 'scoped memory for tpu_custom_call.1']
    #allocation5 [shape = 's32[2]{0}', space=sflag, size = 0x8, scoped, tag = 'scoped memory for tpu_custom_call.1']
    #allocation6 [shape = 'u8[196608]{0}', space=vmem, size = 0x30000, scoped, tag = 'input window, operand 4, single buffered']
    #allocation7 [shape = 's32[1]{0}', space=sflag, size = 0x4, scoped, tag = 'scoped memory for tpu_custom_call.1']
    #allocation8 [shape = 'u8[16384]{0}', space=vmem, size = 0x4000, scoped, tag = 'output window, operand 0']
    %14 = vsyncpa [#allocation4], 0
    %15 = vsyncpa [#allocation7], 0
    %16 = vsyncpa [#allocation5], 0
    %s17 = scalar_lea.sflag [#allocation5], 1
    %18 = vsyncpa %s17, 0
    loop: start=0, step=1, limit=4
    $region2: #{tpu_custom_call.1} parent=1 // loop_pre_header
      _
    $region3: #{tpu_custom_call.1} parent=1 // loop_header
      %s20 = sphi 0, %s24
      %p21 = scmp.ge.s32.totalorder %s20, 4
      %s30 = sphi 0, %s32
      %s33 = sphi 0, %s30
      %s34 = sphi 0, %s33
      %s50 = sphi 0, %s34
      %s54 = sphi 0, %s54
      %s56 = sphi 0, %s54
      %s57 = sphi 0, %s56
      %s71 = sphi 0, %s57
      %s75 = sphi 0, %s75
      %s77 = sphi 0, %s75
      %s78 = sphi 0, %s77
      %s92 = sphi 0, %s78
      %s96 = sphi 0, %s96
      %s98 = sphi 0, %s96
      %s99 = sphi 0, %s98
      %s113 = sphi 0, %s99
      %s117 = sphi 0, %s117
      %s119 = sphi 0, %s117
      %s120 = sphi 0, %s119
      %s134 = sphi 0, %s120
      %s138 = sphi 0, %s138
      %s140 = sphi 0, %s138
      %s141 = sphi 0, %s140
      %s155 = sphi 0, %s141
      %s159 = sphi 0, %s159
      %s161 = sphi 0, %s159
      %s162 = sphi 0, %s161
      %s176 = sphi 0, %s162
      %s180 = sphi 0, %s180
      %s182 = sphi 0, %s180
      %s183 = sphi 0, %s182
      %s197 = sphi 0, %s183
      %s201 = sphi 0, %s201
      %s203 = sphi 0, %s201
      %s204 = sphi 0, %s203
      %s218 = sphi 0, %s204
      %s224 = sphi 0, %s226
      %s227 = sphi 0, %s224
      %s228 = sphi 0, %s227
      %s244 = sphi 0, %s228
    $region4: #{tpu_custom_call.1} parent=1 // loop_header_branch
      %23 = sbr.rel (%p21) target = $region8
    $region5: #{tpu_custom_call.1} parent=1 // loop_body
      %s25 = ssub.s32 %s20, 1
      %s26 = ssub.s32 %s20, 2
      %s27 = sadd.s32 %s20, 1
      %s28 = ssub.s32 %s20, %s27
      %p29 = scmp.eq.s32.totalorder %s28, 0
      %s31 = sadd.s32 %s30, 1
      %s32 = scalar_select %p29, %s30, %s31
      %p35 = pneg %p29
      %p36 = scmp.eq.s32.totalorder %s20, 1
      %p37 = por %p35, %p36
      %p38 = scmp.ne.s32.totalorder %s30, %s33
      %p39 = scmp.eq.s32.totalorder %s20, 0
      %p40 = por %p38, %p39
      %p41 = scmp.ne.s32.totalorder %s30, %s33
      %p42 = scmp.eq.s32.totalorder %s25, 1
      %p43 = por %p41, %p42
      %p44 = scmp.ne.s32.totalorder %s33, %s34
      %p45 = scmp.eq.s32.totalorder %s25, 0
      %p46 = por %p44, %p45
      %p47 = scmp.ne.s32.totalorder %s33, %s34
      %p48 = scmp.eq.s32.totalorder %s26, 1
      %p49 = por %p47, %p48
      %p51 = scmp.ne.s32.totalorder %s34, %s50
      %p52 = scmp.eq.s32.totalorder %s26, 0
      %p53 = por %p51, %p52
      %s55 = sadd.s32 %s54, 1
      %p58 = scmp.eq.s32.totalorder %s20, 1
      %p59 = scmp.ne.s32.totalorder %s54, %s56
      %p60 = scmp.eq.s32.totalorder %s20, 0
      %p61 = por %p59, %p60
      %p62 = scmp.ne.s32.totalorder %s54, %s56
      %p63 = scmp.eq.s32.totalorder %s25, 1
      %p64 = por %p62, %p63
      %p65 = scmp.ne.s32.totalorder %s56, %s57
      %p66 = scmp.eq.s32.totalorder %s25, 0
      %p67 = por %p65, %p66
      %p68 = scmp.ne.s32.totalorder %s56, %s57
      %p69 = scmp.eq.s32.totalorder %s26, 1
      %p70 = por %p68, %p69
      %p72 = scmp.ne.s32.totalorder %s57, %s71
      %p73 = scmp.eq.s32.totalorder %s26, 0
      %p74 = por %p72, %p73
      %s76 = sadd.s32 %s75, 1
      %p79 = scmp.eq.s32.totalorder %s20, 1
      %p80 = scmp.ne.s32.totalorder %s75, %s77
      %p81 = scmp.eq.s32.totalorder %s20, 0
      %p82 = por %p80, %p81
      %p83 = scmp.ne.s32.totalorder %s75, %s77
      %p84 = scmp.eq.s32.totalorder %s25, 1
      %p85 = por %p83, %p84
      %p86 = scmp.ne.s32.totalorder %s77, %s78
      %p87 = scmp.eq.s32.totalorder %s25, 0
      %p88 = por %p86, %p87
      %p89 = scmp.ne.s32.totalorder %s77, %s78
      %p90 = scmp.eq.s32.totalorder %s26, 1
      %p91 = por %p89, %p90
      %p93 = scmp.ne.s32.totalorder %s78, %s92
      %p94 = scmp.eq.s32.totalorder %s26, 0
      %p95 = por %p93, %p94
      %s97 = sadd.s32 %s96, 1
      %p100 = scmp.eq.s32.totalorder %s20, 1
      %p101 = scmp.ne.s32.totalorder %s96, %s98
      %p102 = scmp.eq.s32.totalorder %s20, 0
      %p103 = por %p101, %p102
      %p104 = scmp.ne.s32.totalorder %s96, %s98
      %p105 = scmp.eq.s32.totalorder %s25, 1
      %p106 = por %p104, %p105
      %p107 = scmp.ne.s32.totalorder %s98, %s99
      %p108 = scmp.eq.s32.totalorder %s25, 0
      %p109 = por %p107, %p108
      %p110 = scmp.ne.s32.totalorder %s98, %s99
      %p111 = scmp.eq.s32.totalorder %s26, 1
      %p112 = por %p110, %p111
      %p114 = scmp.ne.s32.totalorder %s99, %s113
      %p115 = scmp.eq.s32.totalorder %s26, 0
      %p116 = por %p114, %p115
      %s118 = sadd.s32 %s117, 1
      %p121 = scmp.eq.s32.totalorder %s20, 1
      %p122 = scmp.ne.s32.totalorder %s117, %s119
      %p123 = scmp.eq.s32.totalorder %s20, 0
      %p124 = por %p122, %p123
      %p125 = scmp.ne.s32.totalorder %s117, %s119
      %p126 = scmp.eq.s32.totalorder %s25, 1
      %p127 = por %p125, %p126
      %p128 = scmp.ne.s32.totalorder %s119, %s120
      %p129 = scmp.eq.s32.totalorder %s25, 0
      %p130 = por %p128, %p129
      %p131 = scmp.ne.s32.totalorder %s119, %s120
      %p132 = scmp.eq.s32.totalorder %s26, 1
      %p133 = por %p131, %p132
      %p135 = scmp.ne.s32.totalorder %s120, %s134
      %p136 = scmp.eq.s32.totalorder %s26, 0
      %p137 = por %p135, %p136
      %s139 = sadd.s32 %s138, 1
      %p142 = scmp.eq.s32.totalorder %s20, 1
      %p143 = scmp.ne.s32.totalorder %s138, %s140
      %p144 = scmp.eq.s32.totalorder %s20, 0
      %p145 = por %p143, %p144
      %p146 = scmp.ne.s32.totalorder %s138, %s140
      %p147 = scmp.eq.s32.totalorder %s25, 1
      %p148 = por %p146, %p147
      %p149 = scmp.ne.s32.totalorder %s140, %s141
      %p150 = scmp.eq.s32.totalorder %s25, 0
      %p151 = por %p149, %p150
      %p152 = scmp.ne.s32.totalorder %s140, %s141
      %p153 = scmp.eq.s32.totalorder %s26, 1
      %p154 = por %p152, %p153
      %p156 = scmp.ne.s32.totalorder %s141, %s155
      %p157 = scmp.eq.s32.totalorder %s26, 0
      %p158 = por %p156, %p157
      %s160 = sadd.s32 %s159, 1
      %p163 = scmp.eq.s32.totalorder %s20, 1
      %p164 = scmp.ne.s32.totalorder %s159, %s161
      %p165 = scmp.eq.s32.totalorder %s20, 0
      %p166 = por %p164, %p165
      %p167 = scmp.ne.s32.totalorder %s159, %s161
      %p168 = scmp.eq.s32.totalorder %s25, 1
      %p169 = por %p167, %p168
      %p170 = scmp.ne.s32.totalorder %s161, %s162
      %p171 = scmp.eq.s32.totalorder %s25, 0
      %p172 = por %p170, %p171
      %p173 = scmp.ne.s32.totalorder %s161, %s162
      %p174 = scmp.eq.s32.totalorder %s26, 1
      %p175 = por %p173, %p174
      %p177 = scmp.ne.s32.totalorder %s162, %s176
      %p178 = scmp.eq.s32.totalorder %s26, 0
      %p179 = por %p177, %p178
      %s181 = sadd.s32 %s180, 1
      %p184 = scmp.eq.s32.totalorder %s20, 1
      %p185 = scmp.ne.s32.totalorder %s180, %s182
      %p186 = scmp.eq.s32.totalorder %s20, 0
      %p187 = por %p185, %p186
      %p188 = scmp.ne.s32.totalorder %s180, %s182
      %p189 = scmp.eq.s32.totalorder %s25, 1
      %p190 = por %p188, %p189
      %p191 = scmp.ne.s32.totalorder %s182, %s183
      %p192 = scmp.eq.s32.totalorder %s25, 0
      %p193 = por %p191, %p192
      %p194 = scmp.ne.s32.totalorder %s182, %s183
      %p195 = scmp.eq.s32.totalorder %s26, 1
      %p196 = por %p194, %p195
      %p198 = scmp.ne.s32.totalorder %s183, %s197
      %p199 = scmp.eq.s32.totalorder %s26, 0
      %p200 = por %p198, %p199
      %s202 = sadd.s32 %s201, 1
      %p205 = scmp.eq.s32.totalorder %s20, 1
      %p206 = scmp.ne.s32.totalorder %s201, %s203
      %p207 = scmp.eq.s32.totalorder %s20, 0
      %p208 = por %p206, %p207
      %p209 = scmp.ne.s32.totalorder %s201, %s203
      %p210 = scmp.eq.s32.totalorder %s25, 1
      %p211 = por %p209, %p210
      %p212 = scmp.ne.s32.totalorder %s203, %s204
      %p213 = scmp.eq.s32.totalorder %s25, 0
      %p214 = por %p212, %p213
      %p215 = scmp.ne.s32.totalorder %s203, %s204
      %p216 = scmp.eq.s32.totalorder %s26, 1
      %p217 = por %p215, %p216
      %p219 = scmp.ne.s32.totalorder %s204, %s218
      %p220 = scmp.eq.s32.totalorder %s26, 0
      %p221 = por %p219, %p220
      %s222 = ssub.s32 %s20, %s27
      %p223 = scmp.eq.s32.totalorder %s222, 0
      %s225 = sadd.s32 %s224, 1
      %s226 = scalar_select %p223, %s224, %s225
      %p229 = pneg %p223
      %p230 = scmp.eq.s32.totalorder %s20, 1
      %p231 = por %p229, %p230
      %p232 = scmp.ne.s32.totalorder %s224, %s227
      %p233 = scmp.eq.s32.totalorder %s20, 0
      %p234 = por %p232, %p233
      %p235 = scmp.ne.s32.totalorder %s224, %s227
      %p236 = scmp.eq.s32.totalorder %s25, 1
      %p237 = por %p235, %p236
      %p238 = scmp.ne.s32.totalorder %s227, %s228
      %p239 = scmp.eq.s32.totalorder %s25, 0
      %p240 = por %p238, %p239
      %p241 = scmp.ne.s32.totalorder %s227, %s228
      %p242 = scmp.eq.s32.totalorder %s26, 1
      %p243 = por %p241, %p242
      %p245 = scmp.ne.s32.totalorder %s228, %s244
      %p246 = scmp.eq.s32.totalorder %s26, 0
      %p247 = por %p245, %p246
      %p248 = scmp.le.s32.totalorder 1, %s20
      %p249 = scmp.lt.s32.totalorder %s20, 3
      %p250 = pnand %p248, %p249
      %p251 = pneg %p250
      // Predicated region
      $region9: #{tpu_custom_call.1} parent=5 // pred_check
        _
      $region10: #{tpu_custom_call.1} parent=5 // pred_check_branch
        %253 = sbr.rel (%p250) target = $region12
      $region11: #{tpu_custom_call.1} parent=5 // pred_region
        %s254 = ssub.s32 %s20, 1
        // Predicated region
        $region13: #{tpu_custom_call.1} parent=11 // pred_check
          %p255 = pneg %p67
        $region14: #{tpu_custom_call.1} parent=11 // pred_check_branch
          %257 = sbr.rel (%p255) target = $region16
        $region15: #{tpu_custom_call.1} parent=11 // pred_region
          %s259 = ssub.s32 6144, 6144
          %260 = vsyncadd [#allocation4], %s259
          %s261 = sshll.u32 [#allocation3], 4
          %s262 = int_to_ptr.vmem [resolvable:$true] %s261
          %267 = dma.hbm_to_vmem [thread:$0]  %s1, 6144, %s262, [#allocation4], 128, 128, 8
        $region16: #{tpu_custom_call.1} parent=11 // pred_fallthru
          _
        // Predicated region
        $region17: #{tpu_custom_call.1} parent=11 // pred_check
          %p268 = pneg %p88
        $region18: #{tpu_custom_call.1} parent=11 // pred_check_branch
          %270 = sbr.rel (%p268) target = $region20
        $region19: #{tpu_custom_call.1} parent=11 // pred_region
          _
        $region20: #{tpu_custom_call.1} parent=11 // pred_fallthru
          _
        // Predicated region
        $region21: #{tpu_custom_call.1} parent=11 // pred_check
          %p271 = pneg %p109
        $region22: #{tpu_custom_call.1} parent=11 // pred_check_branch
          %273 = sbr.rel (%p271) target = $region24
        $region23: #{tpu_custom_call.1} parent=11 // pred_region
          _
        $region24: #{tpu_custom_call.1} parent=11 // pred_fallthru
          _
        // Predicated region
        $region25: #{tpu_custom_call.1} parent=11 // pred_check
          %p274 = pneg %p130
        $region26: #{tpu_custom_call.1} parent=11 // pred_check_branch
          %276 = sbr.rel (%p274) target = $region28
        $region27: #{tpu_custom_call.1} parent=11 // pred_region
          %s278 = ssub.s32 6144, 6144
          %279 = vsyncadd [#allocation7], %s278
          %s280 = sshll.u32 [#allocation6], 4
          %s281 = int_to_ptr.vmem [resolvable:$true] %s280
          %286 = dma.hbm_to_vmem [thread:$0]  %s4, 6144, %s281, [#allocation7], 128, 128, 8
        $region28: #{tpu_custom_call.1} parent=11 // pred_fallthru
          _
        // Predicated region
        $region29: #{tpu_custom_call.1} parent=11 // pred_check
          %p287 = pneg %p151
        $region30: #{tpu_custom_call.1} parent=11 // pred_check_branch
          %289 = sbr.rel (%p287) target = $region32
        $region31: #{tpu_custom_call.1} parent=11 // pred_region
          _
        $region32: #{tpu_custom_call.1} parent=11 // pred_fallthru
          _
        // Predicated region
        $region33: #{tpu_custom_call.1} parent=11 // pred_check
          %p290 = pneg %p172
        $region34: #{tpu_custom_call.1} parent=11 // pred_check_branch
          %292 = sbr.rel (%p290) target = $region36
        $region35: #{tpu_custom_call.1} parent=11 // pred_region
          _
        $region36: #{tpu_custom_call.1} parent=11 // pred_fallthru
          _
        // Predicated region
        $region37: #{tpu_custom_call.1} parent=11 // pred_check
          %p293 = pneg %p193
        $region38: #{tpu_custom_call.1} parent=11 // pred_check_branch
          %295 = sbr.rel (%p293) target = $region40
        $region39: #{tpu_custom_call.1} parent=11 // pred_region
          _
        $region40: #{tpu_custom_call.1} parent=11 // pred_fallthru
          _
        // Predicated region
        $region41: #{tpu_custom_call.1} parent=11 // pred_check
          %p296 = pneg %p214
        $region42: #{tpu_custom_call.1} parent=11 // pred_check_branch
          %298 = sbr.rel (%p296) target = $region44
        $region43: #{tpu_custom_call.1} parent=11 // pred_region
          _
        $region44: #{tpu_custom_call.1} parent=11 // pred_fallthru
          _
      $region12: #{tpu_custom_call.1} parent=5 // pred_fallthru
        _
      %p299 = scmp.lt.s32.totalorder %s20, 2
      // Predicated region
      $region45: #{tpu_custom_call.1} parent=5 // pred_check
        %p300 = pneg %p299
      $region46: #{tpu_custom_call.1} parent=5 // pred_check_branch
        %302 = sbr.rel (%p300) target = $region48
      $region47: #{tpu_custom_call.1} parent=5 // pred_region
        // Predicated region
        $region49: #{tpu_custom_call.1} parent=47 // pred_check
          %p303 = pneg %p40
        $region50: #{tpu_custom_call.1} parent=47 // pred_check_branch
          %305 = sbr.rel (%p303) target = $region52
        $region51: #{tpu_custom_call.1} parent=47 // pred_region
          %p306 = scmp.lt.s32.totalorder %s20, 1
          %s307 = scalar_select %p306, %s20, 1
          %s308 = smul.addr %s307, 2
          %s309 = smul.addr %s308, 8
          %s310 = scalar_lea.vmem %s0, %s309
        $region52: #{tpu_custom_call.1} parent=47 // pred_fallthru
          _
      $region48: #{tpu_custom_call.1} parent=5 // pred_fallthru
        _
      %p311 = scmp.le.s32.totalorder 1, %s20
      %p312 = scmp.lt.s32.totalorder %s20, 3
      %p313 = pnand %p311, %p312
      %p314 = pneg %p313
      // Predicated region
      $region53: #{tpu_custom_call.1} parent=5 // pred_check
        _
      $region54: #{tpu_custom_call.1} parent=5 // pred_check_branch
        %316 = sbr.rel (%p313) target = $region56
      $region55: #{tpu_custom_call.1} parent=5 // pred_region
        %s317 = ssub.s32 %s20, 1
        // Predicated region
        $region57: #{tpu_custom_call.1} parent=55 // pred_check
          %p318 = pneg %p67
        $region58: #{tpu_custom_call.1} parent=55 // pred_check_branch
          %320 = sbr.rel (%p318) target = $region60
        $region59: #{tpu_custom_call.1} parent=55 // pred_region
          %321 = dma.done [#allocation4], 6144
        $region60: #{tpu_custom_call.1} parent=55 // pred_fallthru
          _
        // Predicated region
        $region61: #{tpu_custom_call.1} parent=55 // pred_check
          %p322 = pneg %p130
        $region62: #{tpu_custom_call.1} parent=55 // pred_check_branch
          %324 = sbr.rel (%p322) target = $region64
        $region63: #{tpu_custom_call.1} parent=55 // pred_region
          %325 = dma.done [#allocation7], 6144
        $region64: #{tpu_custom_call.1} parent=55 // pred_fallthru
          _
        %p326 = scmp.lt.s32.totalorder %s25, 1
        %s327 = scalar_select %p326, %s25, 1
        %s328 = smul.addr %s327, 2
        %s329 = smul.addr %s328, 8
        %s330 = scalar_lea.vmem %s0, %s329
        %p331 = pneg %p46
        %p332 = pneg %p43
        %p333 = pneg %p67
        %p334 = pneg %p64
        %p335 = pneg %p88
        %p336 = pneg %p85
        %p337 = pneg %p109
        %p338 = pneg %p106
        %p339 = pneg %p130
        %p340 = pneg %p127
        %p341 = pneg %p151
        %p342 = pneg %p148
        %p343 = pneg %p172
        %p344 = pneg %p169
        %p345 = pneg %p193
        %p346 = pneg %p190
        %p347 = pneg %p214
        %p348 = pneg %p211
        %p349 = pneg %p240
        %p350 = pneg %p237
        %s351 = sand.u32 %s227, 1
        %s352 = scalar_lea.sflag [#allocation5], %s351
        %s353 = sand.u32 %s227, 1
        %s354 = smul.addr %s353, 16
        %s355 = scalar_lea.vmem [#allocation8], %s354
        %p356 = scmp.lt.s32.totalorder %s25, 1
        %s357 = scalar_select %p356, %s25, 1
        %s358 = smul.addr %s357, 2
        %s359 = smul.addr %s358, 8
        %s360 = scalar_lea.vmem %s0, %s359
        %v361 = vld [vmem:[%s360] sm:$0xff]
        %v362 = vld [vmem:[%s360 + $0x8] sm:$0xff]
        %363 = vst [vmem:[#allocation2] sm:$0x1] 0.0
        %364 = vst [vmem:[#allocation2 + $0x11] sm:$0x1] 0.0
        %v365 = vld [vmem:[%s7] sm:$0xff]
        %v366 = vld [vmem:[%s7 + $0x8] sm:$0xff]
        %v367 = vld [vmem:[%s7 + $0x10] sm:$0xff]
        %v368 = vld [vmem:[%s7 + $0x18] sm:$0xff]
        %v369 = vld [vmem:[%s7 + $0x20] sm:$0xff]
        %v370 = vld [vmem:[%s7 + $0x28] sm:$0xff]
        %v371 = vld [vmem:[%s7 + $0x30] sm:$0xff]
        %v372 = vld [vmem:[%s7 + $0x38] sm:$0xff]
        %v373 = vld [vmem:[%s7 + $0x40] sm:$0xff]
        %v374 = vld [vmem:[%s7 + $0x48] sm:$0xff]
        %v375 = vld [vmem:[%s7 + $0x50] sm:$0xff]
        %v376 = vld [vmem:[%s7 + $0x58] sm:$0xff]
        %v377 = vld [vmem:[%s7 + $0x60] sm:$0xff]
        %v378 = vld [vmem:[%s7 + $0x68] sm:$0xff]
        %v379 = vld [vmem:[%s7 + $0x70] sm:$0xff]
        %v380 = vld [vmem:[%s7 + $0x78] sm:$0xff]
        %v381 = vld [vmem:[%s8] sm:$0x3]
        %382 = vst [vmem:[#allocation2 + $0x1] sm:$0xff] %v361
        %383 = vst [vmem:[#allocation2 + $0x9] sm:$0xff] %v362
        %v384 = vld [vmem:[#allocation2] sm:$0xff]
        %v385 = vld [vmem:[#allocation2 + $0x8] sm:$0xff]
        %v386 = vld [vmem:[#allocation3] sm:$0xff]
        %v387 = vld [vmem:[#allocation3 + $0x8] sm:$0xff]
        %v388 = vld [vmem:[#allocation3 + $0x10] sm:$0xff]
        %v389 = vld [vmem:[#allocation3 + $0x18] sm:$0xff]
        %v390 = vld [vmem:[#allocation3 + $0x20] sm:$0xff]
        %v391 = vld [vmem:[#allocation3 + $0x28] sm:$0xff]
        %v392 = vld [vmem:[#allocation3 + $0x30] sm:$0xff]
        %v393 = vld [vmem:[#allocation3 + $0x38] sm:$0xff]
        %v394 = vld [vmem:[#allocation3 + $0x40] sm:$0xff]
        %v395 = vld [vmem:[#allocation3 + $0x48] sm:$0xff]
        %v396 = vld [vmem:[#allocation3 + $0x50] sm:$0xff]
        %v397 = vld [vmem:[#allocation3 + $0x58] sm:$0xff]
        %v398 = vld [vmem:[#allocation3 + $0x60] sm:$0xff]
        %v399 = vld [vmem:[#allocation3 + $0x68] sm:$0xff]
        %v400 = vld [vmem:[#allocation3 + $0x70] sm:$0xff]
        %v401 = vld [vmem:[#allocation3 + $0x78] sm:$0xff]
        %v402 = vld [vmem:[#allocation2 + $0x1] sm:$0xff]
        %v403 = vld [vmem:[#allocation2 + $0x9] sm:$0xff]
        %s404 = scalar_lea.vmem [#allocation3], 128
        %v405 = vld [vmem:[%s404] sm:$0xff]
        %v406 = vld [vmem:[%s404 + $0x8] sm:$0xff]
        %v407 = vld [vmem:[%s404 + $0x10] sm:$0xff]
        %v408 = vld [vmem:[%s404 + $0x18] sm:$0xff]
        %v409 = vld [vmem:[%s404 + $0x20] sm:$0xff]
        %v410 = vld [vmem:[%s404 + $0x28] sm:$0xff]
        %v411 = vld [vmem:[%s404 + $0x30] sm:$0xff]
        %v412 = vld [vmem:[%s404 + $0x38] sm:$0xff]
        %v413 = vld [vmem:[%s404 + $0x40] sm:$0xff]
        %v414 = vld [vmem:[%s404 + $0x48] sm:$0xff]
        %v415 = vld [vmem:[%s404 + $0x50] sm:$0xff]
        %v416 = vld [vmem:[%s404 + $0x58] sm:$0xff]
        %v417 = vld [vmem:[%s404 + $0x60] sm:$0xff]
        %v418 = vld [vmem:[%s404 + $0x68] sm:$0xff]
        %v419 = vld [vmem:[%s404 + $0x70] sm:$0xff]
        %v420 = vld [vmem:[%s404 + $0x78] sm:$0xff]
        %421 = vmatprep.subr.mxu0 0.0
        %422 = vmatpush1.msra.mxu0 %v405
        %423 = vmatprep.subr.mxu0 0.0
        %424 = vmatpush1.msra.mxu0 %v406
        %425 = vmatprep.subr.mxu0 0.0
        %426 = vmatpush1.msra.mxu0 %v407
        %427 = vmatprep.subr.mxu0 0.0
        %428 = vmatpush1.msra.mxu0 %v408
        %429 = vmatprep.subr.mxu0 0.0
        %430 = vmatpush1.msra.mxu0 %v409
        %431 = vmatprep.subr.mxu0 0.0
        %432 = vmatpush1.msra.mxu0 %v410
        %433 = vmatprep.subr.mxu0 0.0
        %434 = vmatpush1.msra.mxu0 %v411
        %435 = vmatprep.subr.mxu0 0.0
        %436 = vmatpush1.msra.mxu0 %v412
        %437 = vmatprep.subr.mxu0 0.0
        %438 = vmatpush1.msra.mxu0 %v413
        %439 = vmatprep.subr.mxu0 0.0
        %440 = vmatpush1.msra.mxu0 %v414
        %441 = vmatprep.subr.mxu0 0.0
        %442 = vmatpush1.msra.mxu0 %v415
        %443 = vmatprep.subr.mxu0 0.0
        %444 = vmatpush1.msra.mxu0 %v416
        %445 = vmatprep.subr.mxu0 0.0
        %446 = vmatpush1.msra.mxu0 %v417
        %447 = vmatprep.subr.mxu0 0.0
        %448 = vmatpush1.msra.mxu0 %v418
        %449 = vmatprep.subr.mxu0 0.0
        %450 = vmatpush1.msra.mxu0 %v419
        %451 = vmatprep.subr.mxu0 0.0
        %452 = vmatpush1.msra.mxu0 %v420
        %453 = vmatprep.subr.mxu0 0.0
        %454 = vmatpush1.msra.mxu0 0.0
        %455 = vmatprep.subr.mxu0 0.0
        %456 = vmatpush1.msra.mxu0 0.0
        %457 = vmatprep.subr.mxu0 0.0
        %458 = vmatpush1.msra.mxu0 0.0
        %459 = vmatprep.subr.mxu0 0.0
        %460 = vmatpush1.msra.mxu0 0.0
        %461 = vmatprep.subr.mxu0 0.0
        %462 = vmatpush1.msra.mxu0 0.0
        %463 = vmatprep.subr.mxu0 0.0
        %464 = vmatpush1.msra.mxu0 0.0
        %465 = vmatprep.subr.mxu0 0.0
        %466 = vmatpush1.msra.mxu0 0.0
        %467 = vmatprep.subr.mxu0 0.0
        %468 = vmatpush1.msra.mxu0 0.0
        %469 = vmatprep.subr.mxu0 0.0
        %470 = vmatpush1.msra.mxu0 0.0
        %471 = vmatprep.subr.mxu0 0.0
        %472 = vmatpush1.msra.mxu0 0.0
        %473 = vmatprep.subr.mxu0 0.0
        %474 = vmatpush1.msra.mxu0 0.0
        %475 = vmatprep.subr.mxu0 0.0
        %476 = vmatpush1.msra.mxu0 0.0
        %477 = vmatprep.subr.mxu0 0.0
        %478 = vmatpush1.msra.mxu0 0.0
        %479 = vmatprep.subr.mxu0 0.0
        %480 = vmatpush1.msra.mxu0 0.0
        %481 = vmatprep.subr.mxu0 0.0
        %482 = vmatpush1.msra.mxu0 0.0
        %483 = vmatprep.subr.mxu0 0.0
        %484 = vmatpush1.msra.mxu0 0.0
        %485 = vmatprep.mubr.f32.mxu0 0.0
        %486 = vmatmul.mubr.f32.gmra.mrb[0].mxu0 %v402
        %v487 = vpop.f32.mrb[0].mxu0
        %v488 = vadd.f32 0.0, %v487
        %v489 = vpop.f32.mrb[0].mxu0
        %490 = vmatprep.mubr.f32.mxu0 0.0
        %491 = vmatmul.mubr.f32.gmra.mrb[0].mxu0 %v403
        %v492 = vpop.f32.mrb[0].mxu0
        %v493 = vadd.f32 0.0, %v492
        %v494 = vpop.f32.mrb[0].mxu0
        %495 = vdwg.mxu0
        %496 = vmatprep.subr.mxu0 0.0
        %497 = vmatpush1.msra.mxu0 %v386
        %498 = vmatprep.subr.mxu0 0.0
        %499 = vmatpush1.msra.mxu0 %v387
        %500 = vmatprep.subr.mxu0 0.0
        %501 = vmatpush1.msra.mxu0 %v388
        %502 = vmatprep.subr.mxu0 0.0
        %503 = vmatpush1.msra.mxu0 %v389
        %504 = vmatprep.subr.mxu0 0.0
        %505 = vmatpush1.msra.mxu0 %v390
        %506 = vmatprep.subr.mxu0 0.0
        %507 = vmatpush1.msra.mxu0 %v391
        %508 = vmatprep.subr.mxu0 0.0
        %509 = vmatpush1.msra.mxu0 %v392
        %510 = vmatprep.subr.mxu0 0.0
        %511 = vmatpush1.msra.mxu0 %v393
        %512 = vmatprep.subr.mxu0 0.0
        %513 = vmatpush1.msra.mxu0 %v394
        %514 = vmatprep.subr.mxu0 0.0
        %515 = vmatpush1.msra.mxu0 %v395
        %516 = vmatprep.subr.mxu0 0.0
        %517 = vmatpush1.msra.mxu0 %v396
        %518 = vmatprep.subr.mxu0 0.0
        %519 = vmatpush1.msra.mxu0 %v397
        %520 = vmatprep.subr.mxu0 0.0
        %521 = vmatpush1.msra.mxu0 %v398
        %522 = vmatprep.subr.mxu0 0.0
        %523 = vmatpush1.msra.mxu0 %v399
        %524 = vmatprep.subr.mxu0 0.0
        %525 = vmatpush1.msra.mxu0 %v400
        %526 = vmatprep.subr.mxu0 0.0
        %527 = vmatpush1.msra.mxu0 %v401
        %528 = vmatprep.subr.mxu0 0.0
        %529 = vmatpush1.msra.mxu0 0.0
        %530 = vmatprep.subr.mxu0 0.0
        %531 = vmatpush1.msra.mxu0 0.0
        %532 = vmatprep.subr.mxu0 0.0
        %533 = vmatpush1.msra.mxu0 0.0
        %534 = vmatprep.subr.mxu0 0.0
        %535 = vmatpush1.msra.mxu0 0.0
        %536 = vmatprep.subr.mxu0 0.0
        %537 = vmatpush1.msra.mxu0 0.0
        %538 = vmatprep.subr.mxu0 0.0
        %539 = vmatpush1.msra.mxu0 0.0
        %540 = vmatprep.subr.mxu0 0.0
        %541 = vmatpush1.msra.mxu0 0.0
        %542 = vmatprep.subr.mxu0 0.0
        %543 = vmatpush1.msra.mxu0 0.0
        %544 = vmatprep.subr.mxu0 0.0
        %545 = vmatpush1.msra.mxu0 0.0
        %546 = vmatprep.subr.mxu0 0.0
        %547 = vmatpush1.msra.mxu0 0.0
        %548 = vmatprep.subr.mxu0 0.0
        %549 = vmatpush1.msra.mxu0 0.0
        %550 = vmatprep.subr.mxu0 0.0
        %551 = vmatpush1.msra.mxu0 0.0
        %552 = vmatprep.subr.mxu0 0.0
        %553 = vmatpush1.msra.mxu0 0.0
        %554 = vmatprep.subr.mxu0 0.0
        %555 = vmatpush1.msra.mxu0 0.0
        %556 = vmatprep.subr.mxu0 0.0
        %557 = vmatpush1.msra.mxu0 0.0
        %558 = vmatprep.subr.mxu0 0.0
        %559 = vmatpush1.msra.mxu0 0.0
        %560 = vmatprep.mubr.f32.mxu0 0.0
        %561 = vmatmul.mubr.f32.gmra.mrb[0].mxu0 %v384
        %v562 = vpop.f32.mrb[0].mxu0
        %v563 = vadd.f32 %v488, %v562
        %v564 = vpop.f32.mrb[0].mxu0
        %565 = vmatprep.mubr.f32.mxu0 0.0
        %566 = vmatmul.mubr.f32.gmra.mrb[0].mxu0 %v385
        %v567 = vpop.f32.mrb[0].mxu0
        %v568 = vadd.f32 %v493, %v567
        %v569 = vpop.f32.mrb[0].mxu0
        %570 = vdwg.mxu0
        %v571 = vld [vmem:[#allocation2 + $0x2] sm:$0xff]
        %v572 = vld [vmem:[#allocation2 + $0xa] sm:$0xff]
        %s573 = scalar_lea.vmem [#allocation3], 256
        %v574 = vld [vmem:[%s573] sm:$0xff]
        %v575 = vld [vmem:[%s573 + $0x8] sm:$0xff]
        %v576 = vld [vmem:[%s573 + $0x10] sm:$0xff]
        %v577 = vld [vmem:[%s573 + $0x18] sm:$0xff]
        %v578 = vld [vmem:[%s573 + $0x20] sm:$0xff]
        %v579 = vld [vmem:[%s573 + $0x28] sm:$0xff]
        %v580 = vld [vmem:[%s573 + $0x30] sm:$0xff]
        %v581 = vld [vmem:[%s573 + $0x38] sm:$0xff]
        %v582 = vld [vmem:[%s573 + $0x40] sm:$0xff]
        %v583 = vld [vmem:[%s573 + $0x48] sm:$0xff]
        %v584 = vld [vmem:[%s573 + $0x50] sm:$0xff]
        %v585 = vld [vmem:[%s573 + $0x58] sm:$0xff]
        %v586 = vld [vmem:[%s573 + $0x60] sm:$0xff]
        %v587 = vld [vmem:[%s573 + $0x68] sm:$0xff]
        %v588 = vld [vmem:[%s573 + $0x70] sm:$0xff]
        %v589 = vld [vmem:[%s573 + $0x78] sm:$0xff]
        %590 = vmatprep.subr.mxu0 0.0
        %591 = vmatpush1.msra.mxu0 %v574
        %592 = vmatprep.subr.mxu0 0.0
        %593 = vmatpush1.msra.mxu0 %v575
        %594 = vmatprep.subr.mxu0 0.0
        %595 = vmatpush1.msra.mxu0 %v576
        %596 = vmatprep.subr.mxu0 0.0
        %597 = vmatpush1.msra.mxu0 %v577
        %598 = vmatprep.subr.mxu0 0.0
        %599 = vmatpush1.msra.mxu0 %v578
        %600 = vmatprep.subr.mxu0 0.0
        %601 = vmatpush1.msra.mxu0 %v579
        %602 = vmatprep.subr.mxu0 0.0
        %603 = vmatpush1.msra.mxu0 %v580
        %604 = vmatprep.subr.mxu0 0.0
        %605 = vmatpush1.msra.mxu0 %v581
        %606 = vmatprep.subr.mxu0 0.0
        %607 = vmatpush1.msra.mxu0 %v582
        %608 = vmatprep.subr.mxu0 0.0
        %609 = vmatpush1.msra.mxu0 %v583
        %610 = vmatprep.subr.mxu0 0.0
        %611 = vmatpush1.msra.mxu0 %v584
        %612 = vmatprep.subr.mxu0 0.0
        %613 = vmatpush1.msra.mxu0 %v585
        %614 = vmatprep.subr.mxu0 0.0
        %615 = vmatpush1.msra.mxu0 %v586
        %616 = vmatprep.subr.mxu0 0.0
        %617 = vmatpush1.msra.mxu0 %v587
        %618 = vmatprep.subr.mxu0 0.0
        %619 = vmatpush1.msra.mxu0 %v588
        %620 = vmatprep.subr.mxu0 0.0
        %621 = vmatpush1.msra.mxu0 %v589
        %622 = vmatprep.subr.mxu0 0.0
        %623 = vmatpush1.msra.mxu0 0.0
        %624 = vmatprep.subr.mxu0 0.0
        %625 = vmatpush1.msra.mxu0 0.0
        %626 = vmatprep.subr.mxu0 0.0
        %627 = vmatpush1.msra.mxu0 0.0
        %628 = vmatprep.subr.mxu0 0.0
        %629 = vmatpush1.msra.mxu0 0.0
        %630 = vmatprep.subr.mxu0 0.0
        %631 = vmatpush1.msra.mxu0 0.0
        %632 = vmatprep.subr.mxu0 0.0
        %633 = vmatpush1.msra.mxu0 0.0
        %634 = vmatprep.subr.mxu0 0.0
        %635 = vmatpush1.msra.mxu0 0.0
        %636 = vmatprep.subr.mxu0 0.0
        %637 = vmatpush1.msra.mxu0 0.0
        %638 = vmatprep.subr.mxu0 0.0
        %639 = vmatpush1.msra.mxu0 0.0
        %640 = vmatprep.subr.mxu0 0.0
        %641 = vmatpush1.msra.mxu0 0.0
        %642 = vmatprep.subr.mxu0 0.0
        %643 = vmatpush1.msra.mxu0 0.0
        %644 = vmatprep.subr.mxu0 0.0
        %645 = vmatpush1.msra.mxu0 0.0
        %646 = vmatprep.subr.mxu0 0.0
        %647 = vmatpush1.msra.mxu0 0.0
        %648 = vmatprep.subr.mxu0 0.0
        %649 = vmatpush1.msra.mxu0 0.0
        %650 = vmatprep.subr.mxu0 0.0
        %651 = vmatpush1.msra.mxu0 0.0
        %652 = vmatprep.subr.mxu0 0.0
        %653 = vmatpush1.msra.mxu0 0.0
        %654 = vmatprep.mubr.f32.mxu0 0.0
        %655 = vmatmul.mubr.f32.gmra.mrb[0].mxu0 %v571
        %v656 = vpop.f32.mrb[0].mxu0
        %v657 = vadd.f32 0.0, %v656
        %v658 = vpop.f32.mrb[0].mxu0
        %659 = vmatprep.mubr.f32.mxu0 0.0
        %660 = vmatmul.mubr.f32.gmra.mrb[0].mxu0 %v572
        %v661 = vpop.f32.mrb[0].mxu0
        %v662 = vadd.f32 0.0, %v661
        %v663 = vpop.f32.mrb[0].mxu0
        %664 = vdwg.mxu0
        %v665 = vadd.f32 %v563, %v657
        %v666 = vadd.f32 %v568, %v662
        %v667 = vld [vmem:[%s2] sm:$0x1]
        %v668 = vld [vmem:[%s3] sm:$0x1]
        %v669 = vadd.f32 %v665, %v666
        %v670 = vrot.slane %v669, 4
        %v671 = vadd.f32 %v669, %v670
        %v672 = vrot.slane %v671, 2
        %v673 = vadd.f32 %v671, %v672
        %v674 = vrot.slane %v673, 1
        %v675 = vadd.f32 %v673, %v674
        %676 = vmatprep.subr.mxu0 0.0
        %677 = vmatpush1.msra.mxu0 %v365
        %678 = vmatprep.subr.mxu0 0.0
        %679 = vmatpush1.msra.mxu0 %v366
        %680 = vmatprep.subr.mxu0 0.0
        %681 = vmatpush1.msra.mxu0 %v367
        %682 = vmatprep.subr.mxu0 0.0
        %683 = vmatpush1.msra.mxu0 %v368
        %684 = vmatprep.subr.mxu0 0.0
        %685 = vmatpush1.msra.mxu0 %v369
        %686 = vmatprep.subr.mxu0 0.0
        %687 = vmatpush1.msra.mxu0 %v370
        %688 = vmatprep.subr.mxu0 0.0
        %689 = vmatpush1.msra.mxu0 %v371
        %690 = vmatprep.subr.mxu0 0.0
        %691 = vmatpush1.msra.mxu0 %v372
        %692 = vmatprep.subr.mxu0 0.0
        %693 = vmatpush1.msra.mxu0 %v373
        %694 = vmatprep.subr.mxu0 0.0
        %695 = vmatpush1.msra.mxu0 %v374
        %696 = vmatprep.subr.mxu0 0.0
        %697 = vmatpush1.msra.mxu0 %v375
        %698 = vmatprep.subr.mxu0 0.0
        %699 = vmatpush1.msra.mxu0 %v376
        %700 = vmatprep.subr.mxu0 0.0
        %701 = vmatpush1.msra.mxu0 %v377
        %702 = vmatprep.subr.mxu0 0.0
        %703 = vmatpush1.msra.mxu0 %v378
        %704 = vmatprep.subr.mxu0 0.0
        %705 = vmatpush1.msra.mxu0 %v379
        %706 = vmatprep.subr.mxu0 0.0
        %707 = vmatpush1.msra.mxu0 %v380
        %708 = vmatprep.subr.mxu0 0.0
        %709 = vmatpush1.msra.mxu0 0.0
        %710 = vmatprep.subr.mxu0 0.0
        %711 = vmatpush1.msra.mxu0 0.0
        %712 = vmatprep.subr.mxu0 0.0
        %713 = vmatpush1.msra.mxu0 0.0
        %714 = vmatprep.subr.mxu0 0.0
        %715 = vmatpush1.msra.mxu0 0.0
        %716 = vmatprep.subr.mxu0 0.0
        %717 = vmatpush1.msra.mxu0 0.0
        %718 = vmatprep.subr.mxu0 0.0
        %719 = vmatpush1.msra.mxu0 0.0
        %720 = vmatprep.subr.mxu0 0.0
        %721 = vmatpush1.msra.mxu0 0.0
        %722 = vmatprep.subr.mxu0 0.0
        %723 = vmatpush1.msra.mxu0 0.0
        %724 = vmatprep.subr.mxu0 0.0
        %725 = vmatpush1.msra.mxu0 0.0
        %726 = vmatprep.subr.mxu0 0.0
        %727 = vmatpush1.msra.mxu0 0.0
        %728 = vmatprep.subr.mxu0 0.0
        %729 = vmatpush1.msra.mxu0 0.0
        %730 = vmatprep.subr.mxu0 0.0
        %731 = vmatpush1.msra.mxu0 0.0
        %732 = vmatprep.subr.mxu0 0.0
        %733 = vmatpush1.msra.mxu0 0.0
        %734 = vmatprep.subr.mxu0 0.0
        %735 = vmatpush1.msra.mxu0 0.0
        %736 = vmatprep.subr.mxu0 0.0
        %737 = vmatpush1.msra.mxu0 0.0
        %738 = vmatprep.subr.mxu0 0.0
        %739 = vmatpush1.msra.mxu0 0.0
        %740 = vmatprep.mubr.f32.mxu0 0.0
        %741 = vmatmul.mubr.f32.gmra.mrb[0].mxu0 %v675
        %v742 = vpop.f32.mrb[0].mxu0
        %v743 = vadd.f32 0.0, %v742
        %v744 = vpop.f32.mrb[0].mxu0
        %745 = vdwg.mxu0
        %v746 = vrcp.pop 1024.0
        %v747 = vmul.f32 %v743, %v746
        %vm748 = vcmask 15360
        %v750 = vsel %vm748, %v747, 0
        %vm752 = vcmask 1041408
        %v754 = vsel %vm752, %v381, 0
        %756 = vmatprep.subr.mxu0 0.0
        %757 = vmatpush1.msra.mxu0 %v754
        %758 = vmatprep.subr.mxu0 0.0
        %759 = vmatpush1.msra.mxu0 0.0
        %760 = vmatprep.subr.mxu0 0.0
        %761 = vmatpush1.msra.mxu0 0.0
        %762 = vmatprep.subr.mxu0 0.0
        %763 = vmatpush1.msra.mxu0 0.0
        %764 = vmatprep.subr.mxu0 0.0
        %765 = vmatpush1.msra.mxu0 0.0
        %766 = vmatprep.subr.mxu0 0.0
        %767 = vmatpush1.msra.mxu0 0.0
        %768 = vmatprep.subr.mxu0 0.0
        %769 = vmatpush1.msra.mxu0 0.0
        %770 = vmatprep.subr.mxu0 0.0
        %771 = vmatpush1.msra.mxu0 0.0
        %772 = vmatprep.subr.mxu0 0.0
        %773 = vmatpush1.msra.mxu0 0.0
        %774 = vmatprep.subr.mxu0 0.0
        %775 = vmatpush1.msra.mxu0 0.0
        %776 = vmatprep.subr.mxu0 0.0
        %777 = vmatpush1.msra.mxu0 0.0
        %778 = vmatprep.subr.mxu0 0.0
        %779 = vmatpush1.msra.mxu0 0.0
        %780 = vmatprep.subr.mxu0 0.0
        %781 = vmatpush1.msra.mxu0 0.0
        %782 = vmatprep.subr.mxu0 0.0
        %783 = vmatpush1.msra.mxu0 0.0
        %784 = vmatprep.subr.mxu0 0.0
        %785 = vmatpush1.msra.mxu0 0.0
        %786 = vmatprep.subr.mxu0 0.0
        %787 = vmatpush1.msra.mxu0 0.0
        %788 = vmatprep.subr.mxu0 0.0
        %789 = vmatpush1.msra.mxu0 0.0
        %790 = vmatprep.subr.mxu0 0.0
        %791 = vmatpush1.msra.mxu0 0.0
        %792 = vmatprep.subr.mxu0 0.0
        %793 = vmatpush1.msra.mxu0 0.0
        %794 = vmatprep.subr.mxu0 0.0
        %795 = vmatpush1.msra.mxu0 0.0
        %796 = vmatprep.subr.mxu0 0.0
        %797 = vmatpush1.msra.mxu0 0.0
        %798 = vmatprep.subr.mxu0 0.0
        %799 = vmatpush1.msra.mxu0 0.0
        %800 = vmatprep.subr.mxu0 0.0
        %801 = vmatpush1.msra.mxu0 0.0
        %802 = vmatprep.subr.mxu0 0.0
        %803 = vmatpush1.msra.mxu0 0.0
        %804 = vmatprep.subr.mxu0 0.0
        %805 = vmatpush1.msra.mxu0 0.0
        %806 = vmatprep.subr.mxu0 0.0
        %807 = vmatpush1.msra.mxu0 0.0
        %808 = vmatprep.subr.mxu0 0.0
        %809 = vmatpush1.msra.mxu0 0.0
        %810 = vmatprep.subr.mxu0 0.0
        %811 = vmatpush1.msra.mxu0 0.0
        %812 = vmatprep.subr.mxu0 0.0
        %813 = vmatpush1.msra.mxu0 0.0
        %814 = vmatprep.subr.mxu0 0.0
        %815 = vmatpush1.msra.mxu0 0.0
        %816 = vmatprep.subr.mxu0 0.0
        %817 = vmatpush1.msra.mxu0 0.0
        %818 = vmatprep.subr.mxu0 0.0
        %819 = vmatpush1.msra.mxu0 0.0
        %820 = vmatprep.mubr.f32.mxu0 0.0
        %821 = vmatmul.mubr.f32.gmra.mrb[0].mxu0 %v750
        %v822 = vpop.f32.mrb[0].mxu0
        %v823 = vadd.f32 0.0, %v822
        %v824 = vpop.f32.mrb[0].mxu0
        %825 = vdwg.mxu0
        %v826 = vlaneseq
        %v827 = vshrl.u32 %v826, 7
        %v828 = vsub.s32 0, %v827
        %v829 = vrot.slane %v823, %v828
        %v830 = vsub.f32 %v665, %v829
        %v831 = vsub.f32 %v666, %v829
        %v832 = vmul.f32 %v830, %v830
        %v833 = vmul.f32 %v831, %v831
        %v834 = vadd.f32 %v832, %v833
        %v835 = vrot.slane %v834, 4
        %v836 = vadd.f32 %v834, %v835
        %v837 = vrot.slane %v836, 2
        %v838 = vadd.f32 %v836, %v837
        %v839 = vrot.slane %v838, 1
        %v840 = vadd.f32 %v838, %v839
        %841 = vmatprep.subr.mxu0 0.0
        %842 = vmatpush1.msra.mxu0 %v365
        %843 = vmatprep.subr.mxu0 0.0
        %844 = vmatpush1.msra.mxu0 %v366
        %845 = vmatprep.subr.mxu0 0.0
        %846 = vmatpush1.msra.mxu0 %v367
        %847 = vmatprep.subr.mxu0 0.0
        %848 = vmatpush1.msra.mxu0 %v368
        %849 = vmatprep.subr.mxu0 0.0
        %850 = vmatpush1.msra.mxu0 %v369
        %851 = vmatprep.subr.mxu0 0.0
        %852 = vmatpush1.msra.mxu0 %v370
        %853 = vmatprep.subr.mxu0 0.0
        %854 = vmatpush1.msra.mxu0 %v371
        %855 = vmatprep.subr.mxu0 0.0
        %856 = vmatpush1.msra.mxu0 %v372
        %857 = vmatprep.subr.mxu0 0.0
        %858 = vmatpush1.msra.mxu0 %v373
        %859 = vmatprep.subr.mxu0 0.0
        %860 = vmatpush1.msra.mxu0 %v374
        %861 = vmatprep.subr.mxu0 0.0
        %862 = vmatpush1.msra.mxu0 %v375
        %863 = vmatprep.subr.mxu0 0.0
        %864 = vmatpush1.msra.mxu0 %v376
        %865 = vmatprep.subr.mxu0 0.0
        %866 = vmatpush1.msra.mxu0 %v377
        %867 = vmatprep.subr.mxu0 0.0
        %868 = vmatpush1.msra.mxu0 %v378
        %869 = vmatprep.subr.mxu0 0.0
        %870 = vmatpush1.msra.mxu0 %v379
        %871 = vmatprep.subr.mxu0 0.0
        %872 = vmatpush1.msra.mxu0 %v380
        %873 = vmatprep.subr.mxu0 0.0
        %874 = vmatpush1.msra.mxu0 0.0
        %875 = vmatprep.subr.mxu0 0.0
        %876 = vmatpush1.msra.mxu0 0.0
        %877 = vmatprep.subr.mxu0 0.0
        %878 = vmatpush1.msra.mxu0 0.0
        %879 = vmatprep.subr.mxu0 0.0
        %880 = vmatpush1.msra.mxu0 0.0
        %881 = vmatprep.subr.mxu0 0.0
        %882 = vmatpush1.msra.mxu0 0.0
        %883 = vmatprep.subr.mxu0 0.0
        %884 = vmatpush1.msra.mxu0 0.0
        %885 = vmatprep.subr.mxu0 0.0
        %886 = vmatpush1.msra.mxu0 0.0
        %887 = vmatprep.subr.mxu0 0.0
        %888 = vmatpush1.msra.mxu0 0.0
        %889 = vmatprep.subr.mxu0 0.0
        %890 = vmatpush1.msra.mxu0 0.0
        %891 = vmatprep.subr.mxu0 0.0
        %892 = vmatpush1.msra.mxu0 0.0
        %893 = vmatprep.subr.mxu0 0.0
        %894 = vmatpush1.msra.mxu0 0.0
        %895 = vmatprep.subr.mxu0 0.0
        %896 = vmatpush1.msra.mxu0 0.0
        %897 = vmatprep.subr.mxu0 0.0
        %898 = vmatpush1.msra.mxu0 0.0
        %899 = vmatprep.subr.mxu0 0.0
        %900 = vmatpush1.msra.mxu0 0.0
        %901 = vmatprep.subr.mxu0 0.0
        %902 = vmatpush1.msra.mxu0 0.0
        %903 = vmatprep.subr.mxu0 0.0
        %904 = vmatpush1.msra.mxu0 0.0
        %905 = vmatprep.mubr.f32.mxu0 0.0
        %906 = vmatmul.mubr.f32.gmra.mrb[0].mxu0 %v840
        %v907 = vpop.f32.mrb[0].mxu0
        %v908 = vadd.f32 0.0, %v907
        %v909 = vpop.f32.mrb[0].mxu0
        %910 = vdwg.mxu0
        %v911 = vmul.f32 %v908, %v746
        %v912 = vadd.f32 %v911, 1e-05
        %v913 = vrsqrt.pop %v912
        %v915 = vsel %vm748, %v913, 0
        %917 = vmatprep.subr.mxu0 0.0
        %918 = vmatpush1.msra.mxu0 %v754
        %919 = vmatprep.subr.mxu0 0.0
        %920 = vmatpush1.msra.mxu0 0.0
        %921 = vmatprep.subr.mxu0 0.0
        %922 = vmatpush1.msra.mxu0 0.0
        %923 = vmatprep.subr.mxu0 0.0
        %924 = vmatpush1.msra.mxu0 0.0
        %925 = vmatprep.subr.mxu0 0.0
        %926 = vmatpush1.msra.mxu0 0.0
        %927 = vmatprep.subr.mxu0 0.0
        %928 = vmatpush1.msra.mxu0 0.0
        %929 = vmatprep.subr.mxu0 0.0
        %930 = vmatpush1.msra.mxu0 0.0
        %931 = vmatprep.subr.mxu0 0.0
        %932 = vmatpush1.msra.mxu0 0.0
        %933 = vmatprep.subr.mxu0 0.0
        %934 = vmatpush1.msra.mxu0 0.0
        %935 = vmatprep.subr.mxu0 0.0
        %936 = vmatpush1.msra.mxu0 0.0
        %937 = vmatprep.subr.mxu0 0.0
        %938 = vmatpush1.msra.mxu0 0.0
        %939 = vmatprep.subr.mxu0 0.0
        %940 = vmatpush1.msra.mxu0 0.0
        %941 = vmatprep.subr.mxu0 0.0
        %942 = vmatpush1.msra.mxu0 0.0
        %943 = vmatprep.subr.mxu0 0.0
        %944 = vmatpush1.msra.mxu0 0.0
        %945 = vmatprep.subr.mxu0 0.0
        %946 = vmatpush1.msra.mxu0 0.0
        %947 = vmatprep.subr.mxu0 0.0
        %948 = vmatpush1.msra.mxu0 0.0
        %949 = vmatprep.subr.mxu0 0.0
        %950 = vmatpush1.msra.mxu0 0.0
        %951 = vmatprep.subr.mxu0 0.0
        %952 = vmatpush1.msra.mxu0 0.0
        %953 = vmatprep.subr.mxu0 0.0
        %954 = vmatpush1.msra.mxu0 0.0
        %955 = vmatprep.subr.mxu0 0.0
        %956 = vmatpush1.msra.mxu0 0.0
        %957 = vmatprep.subr.mxu0 0.0
        %958 = vmatpush1.msra.mxu0 0.0
        %959 = vmatprep.subr.mxu0 0.0
        %960 = vmatpush1.msra.mxu0 0.0
        %961 = vmatprep.subr.mxu0 0.0
        %962 = vmatpush1.msra.mxu0 0.0
        %963 = vmatprep.subr.mxu0 0.0
        %964 = vmatpush1.msra.mxu0 0.0
        %965 = vmatprep.subr.mxu0 0.0
        %966 = vmatpush1.msra.mxu0 0.0
        %967 = vmatprep.subr.mxu0 0.0
        %968 = vmatpush1.msra.mxu0 0.0
        %969 = vmatprep.subr.mxu0 0.0
        %970 = vmatpush1.msra.mxu0 0.0
        %971 = vmatprep.subr.mxu0 0.0
        %972 = vmatpush1.msra.mxu0 0.0
        %973 = vmatprep.subr.mxu0 0.0
        %974 = vmatpush1.msra.mxu0 0.0
        %975 = vmatprep.subr.mxu0 0.0
        %976 = vmatpush1.msra.mxu0 0.0
        %977 = vmatprep.subr.mxu0 0.0
        %978 = vmatpush1.msra.mxu0 0.0
        %979 = vmatprep.subr.mxu0 0.0
        %980 = vmatpush1.msra.mxu0 0.0
        %981 = vmatprep.mubr.f32.mxu0 0.0
        %982 = vmatmul.mubr.f32.gmra.mrb[0].mxu0 %v915
        %v983 = vpop.f32.mrb[0].mxu0
        %v984 = vadd.f32 0.0, %v983
        %v985 = vpop.f32.mrb[0].mxu0
        %986 = vdwg.mxu0
        %v987 = vlaneseq
        %v988 = vshrl.u32 %v987, 7
        %v989 = vsub.s32 0, %v988
        %v990 = vrot.slane %v984, %v989
        %v991 = vmul.f32 %v830, %v990
        %v992 = vmul.f32 %v831, %v990
        %v994 = vlaneseq
        %v995 = vshrl.u32 %v994, 7
        %v996 = vsub.s32 0, %v995
        %v997 = vrot.slane %v667, %v996
        %v999 = vmul.f32 %v991, %v997
        %v1000 = vmul.f32 %v992, %v997
        %v1002 = vlaneseq
        %v1003 = vshrl.u32 %v1002, 7
        %v1004 = vsub.s32 0, %v1003
        %v1005 = vrot.slane %v668, %v1004
        %v1007 = vadd.f32 %v999, %v1005
        %v1008 = vadd.f32 %v1000, %v1005
        %v1009 = vmax.f32 %v1007, 0.0
        %v1010 = vmax.f32 %v1008, 0.0
        %1011 = vst [vmem:[#allocation2 + $0x1] sm:$0xff] %v1009
        %1012 = vst [vmem:[#allocation2 + $0x9] sm:$0xff] %v1010
        %v1013 = vld [vmem:[#allocation2] sm:$0xff]
        %v1014 = vld [vmem:[#allocation2 + $0x8] sm:$0xff]
        %v1015 = vld [vmem:[#allocation6] sm:$0xff]
        %v1016 = vld [vmem:[#allocation6 + $0x8] sm:$0xff]
        %v1017 = vld [vmem:[#allocation6 + $0x10] sm:$0xff]
        %v1018 = vld [vmem:[#allocation6 + $0x18] sm:$0xff]
        %v1019 = vld [vmem:[#allocation6 + $0x20] sm:$0xff]
        %v1020 = vld [vmem:[#allocation6 + $0x28] sm:$0xff]
        %v1021 = vld [vmem:[#allocation6 + $0x30] sm:$0xff]
        %v1022 = vld [vmem:[#allocation6 + $0x38] sm:$0xff]
        %v1023 = vld [vmem:[#allocation6 + $0x40] sm:$0xff]
        %v1024 = vld [vmem:[#allocation6 + $0x48] sm:$0xff]
        %v1025 = vld [vmem:[#allocation6 + $0x50] sm:$0xff]
        %v1026 = vld [vmem:[#allocation6 + $0x58] sm:$0xff]
        %v1027 = vld [vmem:[#allocation6 + $0x60] sm:$0xff]
        %v1028 = vld [vmem:[#allocation6 + $0x68] sm:$0xff]
        %v1029 = vld [vmem:[#allocation6 + $0x70] sm:$0xff]
        %v1030 = vld [vmem:[#allocation6 + $0x78] sm:$0xff]
        %v1031 = vld [vmem:[#allocation2 + $0x1] sm:$0xff]
        %v1032 = vld [vmem:[#allocation2 + $0x9] sm:$0xff]
        %s1033 = scalar_lea.vmem [#allocation6], 128
        %v1034 = vld [vmem:[%s1033] sm:$0xff]
        %v1035 = vld [vmem:[%s1033 + $0x8] sm:$0xff]
        %v1036 = vld [vmem:[%s1033 + $0x10] sm:$0xff]
        %v1037 = vld [vmem:[%s1033 + $0x18] sm:$0xff]
        %v1038 = vld [vmem:[%s1033 + $0x20] sm:$0xff]
        %v1039 = vld [vmem:[%s1033 + $0x28] sm:$0xff]
        %v1040 = vld [vmem:[%s1033 + $0x30] sm:$0xff]
        %v1041 = vld [vmem:[%s1033 + $0x38] sm:$0xff]
        %v1042 = vld [vmem:[%s1033 + $0x40] sm:$0xff]
        %v1043 = vld [vmem:[%s1033 + $0x48] sm:$0xff]
        %v1044 = vld [vmem:[%s1033 + $0x50] sm:$0xff]
        %v1045 = vld [vmem:[%s1033 + $0x58] sm:$0xff]
        %v1046 = vld [vmem:[%s1033 + $0x60] sm:$0xff]
        %v1047 = vld [vmem:[%s1033 + $0x68] sm:$0xff]
        %v1048 = vld [vmem:[%s1033 + $0x70] sm:$0xff]
        %v1049 = vld [vmem:[%s1033 + $0x78] sm:$0xff]
        %1050 = vmatprep.subr.mxu0 0.0
        %1051 = vmatpush1.msra.mxu0 %v1034
        %1052 = vmatprep.subr.mxu0 0.0
        %1053 = vmatpush1.msra.mxu0 %v1035
        %1054 = vmatprep.subr.mxu0 0.0
        %1055 = vmatpush1.msra.mxu0 %v1036
        %1056 = vmatprep.subr.mxu0 0.0
        %1057 = vmatpush1.msra.mxu0 %v1037
        %1058 = vmatprep.subr.mxu0 0.0
        %1059 = vmatpush1.msra.mxu0 %v1038
        %1060 = vmatprep.subr.mxu0 0.0
        %1061 = vmatpush1.msra.mxu0 %v1039
        %1062 = vmatprep.subr.mxu0 0.0
        %1063 = vmatpush1.msra.mxu0 %v1040
        %1064 = vmatprep.subr.mxu0 0.0
        %1065 = vmatpush1.msra.mxu0 %v1041
        %1066 = vmatprep.subr.mxu0 0.0
        %1067 = vmatpush1.msra.mxu0 %v1042
        %1068 = vmatprep.subr.mxu0 0.0
        %1069 = vmatpush1.msra.mxu0 %v1043
        %1070 = vmatprep.subr.mxu0 0.0
        %1071 = vmatpush1.msra.mxu0 %v1044
        %1072 = vmatprep.subr.mxu0 0.0
        %1073 = vmatpush1.msra.mxu0 %v1045
        %1074 = vmatprep.subr.mxu0 0.0
        %1075 = vmatpush1.msra.mxu0 %v1046
        %1076 = vmatprep.subr.mxu0 0.0
        %1077 = vmatpush1.msra.mxu0 %v1047
        %1078 = vmatprep.subr.mxu0 0.0
        %1079 = vmatpush1.msra.mxu0 %v1048
        %1080 = vmatprep.subr.mxu0 0.0
        %1081 = vmatpush1.msra.mxu0 %v1049
        %1082 = vmatprep.subr.mxu0 0.0
        %1083 = vmatpush1.msra.mxu0 0.0
        %1084 = vmatprep.subr.mxu0 0.0
        %1085 = vmatpush1.msra.mxu0 0.0
        %1086 = vmatprep.subr.mxu0 0.0
        %1087 = vmatpush1.msra.mxu0 0.0
        %1088 = vmatprep.subr.mxu0 0.0
        %1089 = vmatpush1.msra.mxu0 0.0
        %1090 = vmatprep.subr.mxu0 0.0
        %1091 = vmatpush1.msra.mxu0 0.0
        %1092 = vmatprep.subr.mxu0 0.0
        %1093 = vmatpush1.msra.mxu0 0.0
        %1094 = vmatprep.subr.mxu0 0.0
        %1095 = vmatpush1.msra.mxu0 0.0
        %1096 = vmatprep.subr.mxu0 0.0
        %1097 = vmatpush1.msra.mxu0 0.0
        %1098 = vmatprep.subr.mxu0 0.0
        %1099 = vmatpush1.msra.mxu0 0.0
        %1100 = vmatprep.subr.mxu0 0.0
        %1101 = vmatpush1.msra.mxu0 0.0
        %1102 = vmatprep.subr.mxu0 0.0
        %1103 = vmatpush1.msra.mxu0 0.0
        %1104 = vmatprep.subr.mxu0 0.0
        %1105 = vmatpush1.msra.mxu0 0.0
        %1106 = vmatprep.subr.mxu0 0.0
        %1107 = vmatpush1.msra.mxu0 0.0
        %1108 = vmatprep.subr.mxu0 0.0
        %1109 = vmatpush1.msra.mxu0 0.0
        %1110 = vmatprep.subr.mxu0 0.0
        %1111 = vmatpush1.msra.mxu0 0.0
        %1112 = vmatprep.subr.mxu0 0.0
        %1113 = vmatpush1.msra.mxu0 0.0
        %1114 = vmatprep.mubr.f32.mxu0 0.0
        %1115 = vmatmul.mubr.f32.gmra.mrb[0].mxu0 %v1031
        %v1116 = vpop.f32.mrb[0].mxu0
        %v1117 = vadd.f32 0.0, %v1116
        %v1118 = vpop.f32.mrb[0].mxu0
        %1119 = vmatprep.mubr.f32.mxu0 0.0
        %1120 = vmatmul.mubr.f32.gmra.mrb[0].mxu0 %v1032
        %v1121 = vpop.f32.mrb[0].mxu0
        %v1122 = vadd.f32 0.0, %v1121
        %v1123 = vpop.f32.mrb[0].mxu0
        %1124 = vdwg.mxu0
        %1125 = vmatprep.subr.mxu0 0.0
        %1126 = vmatpush1.msra.mxu0 %v1015
        %1127 = vmatprep.subr.mxu0 0.0
        %1128 = vmatpush1.msra.mxu0 %v1016
        %1129 = vmatprep.subr.mxu0 0.0
        %1130 = vmatpush1.msra.mxu0 %v1017
        %1131 = vmatprep.subr.mxu0 0.0
        %1132 = vmatpush1.msra.mxu0 %v1018
        %1133 = vmatprep.subr.mxu0 0.0
        %1134 = vmatpush1.msra.mxu0 %v1019
        %1135 = vmatprep.subr.mxu0 0.0
        %1136 = vmatpush1.msra.mxu0 %v1020
        %1137 = vmatprep.subr.mxu0 0.0
        %1138 = vmatpush1.msra.mxu0 %v1021
        %1139 = vmatprep.subr.mxu0 0.0
        %1140 = vmatpush1.msra.mxu0 %v1022
        %1141 = vmatprep.subr.mxu0 0.0
        %1142 = vmatpush1.msra.mxu0 %v1023
        %1143 = vmatprep.subr.mxu0 0.0
        %1144 = vmatpush1.msra.mxu0 %v1024
        %1145 = vmatprep.subr.mxu0 0.0
        %1146 = vmatpush1.msra.mxu0 %v1025
        %1147 = vmatprep.subr.mxu0 0.0
        %1148 = vmatpush1.msra.mxu0 %v1026
        %1149 = vmatprep.subr.mxu0 0.0
        %1150 = vmatpush1.msra.mxu0 %v1027
        %1151 = vmatprep.subr.mxu0 0.0
        %1152 = vmatpush1.msra.mxu0 %v1028
        %1153 = vmatprep.subr.mxu0 0.0
        %1154 = vmatpush1.msra.mxu0 %v1029
        %1155 = vmatprep.subr.mxu0 0.0
        %1156 = vmatpush1.msra.mxu0 %v1030
        %1157 = vmatprep.subr.mxu0 0.0
        %1158 = vmatpush1.msra.mxu0 0.0
        %1159 = vmatprep.subr.mxu0 0.0
        %1160 = vmatpush1.msra.mxu0 0.0
        %1161 = vmatprep.subr.mxu0 0.0
        %1162 = vmatpush1.msra.mxu0 0.0
        %1163 = vmatprep.subr.mxu0 0.0
        %1164 = vmatpush1.msra.mxu0 0.0
        %1165 = vmatprep.subr.mxu0 0.0
        %1166 = vmatpush1.msra.mxu0 0.0
        %1167 = vmatprep.subr.mxu0 0.0
        %1168 = vmatpush1.msra.mxu0 0.0
        %1169 = vmatprep.subr.mxu0 0.0
        %1170 = vmatpush1.msra.mxu0 0.0
        %1171 = vmatprep.subr.mxu0 0.0
        %1172 = vmatpush1.msra.mxu0 0.0
        %1173 = vmatprep.subr.mxu0 0.0
        %1174 = vmatpush1.msra.mxu0 0.0
        %1175 = vmatprep.subr.mxu0 0.0
        %1176 = vmatpush1.msra.mxu0 0.0
        %1177 = vmatprep.subr.mxu0 0.0
        %1178 = vmatpush1.msra.mxu0 0.0
        %1179 = vmatprep.subr.mxu0 0.0
        %1180 = vmatpush1.msra.mxu0 0.0
        %1181 = vmatprep.subr.mxu0 0.0
        %1182 = vmatpush1.msra.mxu0 0.0
        %1183 = vmatprep.subr.mxu0 0.0
        %1184 = vmatpush1.msra.mxu0 0.0
        %1185 = vmatprep.subr.mxu0 0.0
        %1186 = vmatpush1.msra.mxu0 0.0
        %1187 = vmatprep.subr.mxu0 0.0
        %1188 = vmatpush1.msra.mxu0 0.0
        %1189 = vmatprep.mubr.f32.mxu0 0.0
        %1190 = vmatmul.mubr.f32.gmra.mrb[0].mxu0 %v1013
        %v1191 = vpop.f32.mrb[0].mxu0
        %v1192 = vadd.f32 %v1117, %v1191
        %v1193 = vpop.f32.mrb[0].mxu0
        %1194 = vmatprep.mubr.f32.mxu0 0.0
        %1195 = vmatmul.mubr.f32.gmra.mrb[0].mxu0 %v1014
        %v1196 = vpop.f32.mrb[0].mxu0
        %v1197 = vadd.f32 %v1122, %v1196
        %v1198 = vpop.f32.mrb[0].mxu0
        %1199 = vdwg.mxu0
        %v1200 = vld [vmem:[#allocation2 + $0x2] sm:$0xff]
        %v1201 = vld [vmem:[#allocation2 + $0xa] sm:$0xff]
        %s1202 = scalar_lea.vmem [#allocation6], 256
        %v1203 = vld [vmem:[%s1202] sm:$0xff]
        %v1204 = vld [vmem:[%s1202 + $0x8] sm:$0xff]
        %v1205 = vld [vmem:[%s1202 + $0x10] sm:$0xff]
        %v1206 = vld [vmem:[%s1202 + $0x18] sm:$0xff]
        %v1207 = vld [vmem:[%s1202 + $0x20] sm:$0xff]
        %v1208 = vld [vmem:[%s1202 + $0x28] sm:$0xff]
        %v1209 = vld [vmem:[%s1202 + $0x30] sm:$0xff]
        %v1210 = vld [vmem:[%s1202 + $0x38] sm:$0xff]
        %v1211 = vld [vmem:[%s1202 + $0x40] sm:$0xff]
        %v1212 = vld [vmem:[%s1202 + $0x48] sm:$0xff]
        %v1213 = vld [vmem:[%s1202 + $0x50] sm:$0xff]
        %v1214 = vld [vmem:[%s1202 + $0x58] sm:$0xff]
        %v1215 = vld [vmem:[%s1202 + $0x60] sm:$0xff]
        %v1216 = vld [vmem:[%s1202 + $0x68] sm:$0xff]
        %v1217 = vld [vmem:[%s1202 + $0x70] sm:$0xff]
        %v1218 = vld [vmem:[%s1202 + $0x78] sm:$0xff]
        %1219 = vmatprep.subr.mxu0 0.0
        %1220 = vmatpush1.msra.mxu0 %v1203
        %1221 = vmatprep.subr.mxu0 0.0
        %1222 = vmatpush1.msra.mxu0 %v1204
        %1223 = vmatprep.subr.mxu0 0.0
        %1224 = vmatpush1.msra.mxu0 %v1205
        %1225 = vmatprep.subr.mxu0 0.0
        %1226 = vmatpush1.msra.mxu0 %v1206
        %1227 = vmatprep.subr.mxu0 0.0
        %1228 = vmatpush1.msra.mxu0 %v1207
        %1229 = vmatprep.subr.mxu0 0.0
        %1230 = vmatpush1.msra.mxu0 %v1208
        %1231 = vmatprep.subr.mxu0 0.0
        %1232 = vmatpush1.msra.mxu0 %v1209
        %1233 = vmatprep.subr.mxu0 0.0
        %1234 = vmatpush1.msra.mxu0 %v1210
        %1235 = vmatprep.subr.mxu0 0.0
        %1236 = vmatpush1.msra.mxu0 %v1211
        %1237 = vmatprep.subr.mxu0 0.0
        %1238 = vmatpush1.msra.mxu0 %v1212
        %1239 = vmatprep.subr.mxu0 0.0
        %1240 = vmatpush1.msra.mxu0 %v1213
        %1241 = vmatprep.subr.mxu0 0.0
        %1242 = vmatpush1.msra.mxu0 %v1214
        %1243 = vmatprep.subr.mxu0 0.0
        %1244 = vmatpush1.msra.mxu0 %v1215
        %1245 = vmatprep.subr.mxu0 0.0
        %1246 = vmatpush1.msra.mxu0 %v1216
        %1247 = vmatprep.subr.mxu0 0.0
        %1248 = vmatpush1.msra.mxu0 %v1217
        %1249 = vmatprep.subr.mxu0 0.0
        %1250 = vmatpush1.msra.mxu0 %v1218
        %1251 = vmatprep.subr.mxu0 0.0
        %1252 = vmatpush1.msra.mxu0 0.0
        %1253 = vmatprep.subr.mxu0 0.0
        %1254 = vmatpush1.msra.mxu0 0.0
        %1255 = vmatprep.subr.mxu0 0.0
        %1256 = vmatpush1.msra.mxu0 0.0
        %1257 = vmatprep.subr.mxu0 0.0
        %1258 = vmatpush1.msra.mxu0 0.0
        %1259 = vmatprep.subr.mxu0 0.0
        %1260 = vmatpush1.msra.mxu0 0.0
        %1261 = vmatprep.subr.mxu0 0.0
        %1262 = vmatpush1.msra.mxu0 0.0
        %1263 = vmatprep.subr.mxu0 0.0
        %1264 = vmatpush1.msra.mxu0 0.0
        %1265 = vmatprep.subr.mxu0 0.0
        %1266 = vmatpush1.msra.mxu0 0.0
        %1267 = vmatprep.subr.mxu0 0.0
        %1268 = vmatpush1.msra.mxu0 0.0
        %1269 = vmatprep.subr.mxu0 0.0
        %1270 = vmatpush1.msra.mxu0 0.0
        %1271 = vmatprep.subr.mxu0 0.0
        %1272 = vmatpush1.msra.mxu0 0.0
        %1273 = vmatprep.subr.mxu0 0.0
        %1274 = vmatpush1.msra.mxu0 0.0
        %1275 = vmatprep.subr.mxu0 0.0
        %1276 = vmatpush1.msra.mxu0 0.0
        %1277 = vmatprep.subr.mxu0 0.0
        %1278 = vmatpush1.msra.mxu0 0.0
        %1279 = vmatprep.subr.mxu0 0.0
        %1280 = vmatpush1.msra.mxu0 0.0
        %1281 = vmatprep.subr.mxu0 0.0
        %1282 = vmatpush1.msra.mxu0 0.0
        %1283 = vmatprep.mubr.f32.mxu0 0.0
        %1284 = vmatmul.mubr.f32.gmra.mrb[0].mxu0 %v1200
        %v1285 = vpop.f32.mrb[0].mxu0
        %v1286 = vadd.f32 0.0, %v1285
        %v1287 = vpop.f32.mrb[0].mxu0
        %1288 = vmatprep.mubr.f32.mxu0 0.0
        %1289 = vmatmul.mubr.f32.gmra.mrb[0].mxu0 %v1201
        %v1290 = vpop.f32.mrb[0].mxu0
        %v1291 = vadd.f32 0.0, %v1290
        %v1292 = vpop.f32.mrb[0].mxu0
        %1293 = vdwg.mxu0
        %v1294 = vadd.f32 %v1192, %v1286
        %v1295 = vadd.f32 %v1197, %v1291
        %v1296 = vld [vmem:[%s5] sm:$0x1]
        %v1297 = vld [vmem:[%s6] sm:$0x1]
        %v1298 = vadd.f32 %v1294, %v1295
        %v1299 = vrot.slane %v1298, 4
        %v1300 = vadd.f32 %v1298, %v1299
        %v1301 = vrot.slane %v1300, 2
        %v1302 = vadd.f32 %v1300, %v1301
        %v1303 = vrot.slane %v1302, 1
        %v1304 = vadd.f32 %v1302, %v1303
        %1305 = vmatprep.subr.mxu0 0.0
        %1306 = vmatpush1.msra.mxu0 %v365
        %1307 = vmatprep.subr.mxu0 0.0
        %1308 = vmatpush1.msra.mxu0 %v366
        %1309 = vmatprep.subr.mxu0 0.0
        %1310 = vmatpush1.msra.mxu0 %v367
        %1311 = vmatprep.subr.mxu0 0.0
        %1312 = vmatpush1.msra.mxu0 %v368
        %1313 = vmatprep.subr.mxu0 0.0
        %1314 = vmatpush1.msra.mxu0 %v369
        %1315 = vmatprep.subr.mxu0 0.0
        %1316 = vmatpush1.msra.mxu0 %v370
        %1317 = vmatprep.subr.mxu0 0.0
        %1318 = vmatpush1.msra.mxu0 %v371
        %1319 = vmatprep.subr.mxu0 0.0
        %1320 = vmatpush1.msra.mxu0 %v372
        %1321 = vmatprep.subr.mxu0 0.0
        %1322 = vmatpush1.msra.mxu0 %v373
        %1323 = vmatprep.subr.mxu0 0.0
        %1324 = vmatpush1.msra.mxu0 %v374
        %1325 = vmatprep.subr.mxu0 0.0
        %1326 = vmatpush1.msra.mxu0 %v375
        %1327 = vmatprep.subr.mxu0 0.0
        %1328 = vmatpush1.msra.mxu0 %v376
        %1329 = vmatprep.subr.mxu0 0.0
        %1330 = vmatpush1.msra.mxu0 %v377
        %1331 = vmatprep.subr.mxu0 0.0
        %1332 = vmatpush1.msra.mxu0 %v378
        %1333 = vmatprep.subr.mxu0 0.0
        %1334 = vmatpush1.msra.mxu0 %v379
        %1335 = vmatprep.subr.mxu0 0.0
        %1336 = vmatpush1.msra.mxu0 %v380
        %1337 = vmatprep.subr.mxu0 0.0
        %1338 = vmatpush1.msra.mxu0 0.0
        %1339 = vmatprep.subr.mxu0 0.0
        %1340 = vmatpush1.msra.mxu0 0.0
        %1341 = vmatprep.subr.mxu0 0.0
        %1342 = vmatpush1.msra.mxu0 0.0
        %1343 = vmatprep.subr.mxu0 0.0
        %1344 = vmatpush1.msra.mxu0 0.0
        %1345 = vmatprep.subr.mxu0 0.0
        %1346 = vmatpush1.msra.mxu0 0.0
        %1347 = vmatprep.subr.mxu0 0.0
        %1348 = vmatpush1.msra.mxu0 0.0
        %1349 = vmatprep.subr.mxu0 0.0
        %1350 = vmatpush1.msra.mxu0 0.0
        %1351 = vmatprep.subr.mxu0 0.0
        %1352 = vmatpush1.msra.mxu0 0.0
        %1353 = vmatprep.subr.mxu0 0.0
        %1354 = vmatpush1.msra.mxu0 0.0
        %1355 = vmatprep.subr.mxu0 0.0
        %1356 = vmatpush1.msra.mxu0 0.0
        %1357 = vmatprep.subr.mxu0 0.0
        %1358 = vmatpush1.msra.mxu0 0.0
        %1359 = vmatprep.subr.mxu0 0.0
        %1360 = vmatpush1.msra.mxu0 0.0
        %1361 = vmatprep.subr.mxu0 0.0
        %1362 = vmatpush1.msra.mxu0 0.0
        %1363 = vmatprep.subr.mxu0 0.0
        %1364 = vmatpush1.msra.mxu0 0.0
        %1365 = vmatprep.subr.mxu0 0.0
        %1366 = vmatpush1.msra.mxu0 0.0
        %1367 = vmatprep.subr.mxu0 0.0
        %1368 = vmatpush1.msra.mxu0 0.0
        %1369 = vmatprep.mubr.f32.mxu0 0.0
        %1370 = vmatmul.mubr.f32.gmra.mrb[0].mxu0 %v1304
        %v1371 = vpop.f32.mrb[0].mxu0
        %v1372 = vadd.f32 0.0, %v1371
        %v1373 = vpop.f32.mrb[0].mxu0
        %1374 = vdwg.mxu0
        %v1375 = vmul.f32 %v1372, %v746
        %v1377 = vsel %vm748, %v1375, 0
        %1379 = vmatprep.subr.mxu0 0.0
        %1380 = vmatpush1.msra.mxu0 %v754
        %1381 = vmatprep.subr.mxu0 0.0
        %1382 = vmatpush1.msra.mxu0 0.0
        %1383 = vmatprep.subr.mxu0 0.0
        %1384 = vmatpush1.msra.mxu0 0.0
        %1385 = vmatprep.subr.mxu0 0.0
        %1386 = vmatpush1.msra.mxu0 0.0
        %1387 = vmatprep.subr.mxu0 0.0
        %1388 = vmatpush1.msra.mxu0 0.0
        %1389 = vmatprep.subr.mxu0 0.0
        %1390 = vmatpush1.msra.mxu0 0.0
        %1391 = vmatprep.subr.mxu0 0.0
        %1392 = vmatpush1.msra.mxu0 0.0
        %1393 = vmatprep.subr.mxu0 0.0
        %1394 = vmatpush1.msra.mxu0 0.0
        %1395 = vmatprep.subr.mxu0 0.0
        %1396 = vmatpush1.msra.mxu0 0.0
        %1397 = vmatprep.subr.mxu0 0.0
        %1398 = vmatpush1.msra.mxu0 0.0
        %1399 = vmatprep.subr.mxu0 0.0
        %1400 = vmatpush1.msra.mxu0 0.0
        %1401 = vmatprep.subr.mxu0 0.0
        %1402 = vmatpush1.msra.mxu0 0.0
        %1403 = vmatprep.subr.mxu0 0.0
        %1404 = vmatpush1.msra.mxu0 0.0
        %1405 = vmatprep.subr.mxu0 0.0
        %1406 = vmatpush1.msra.mxu0 0.0
        %1407 = vmatprep.subr.mxu0 0.0
        %1408 = vmatpush1.msra.mxu0 0.0
        %1409 = vmatprep.subr.mxu0 0.0
        %1410 = vmatpush1.msra.mxu0 0.0
        %1411 = vmatprep.subr.mxu0 0.0
        %1412 = vmatpush1.msra.mxu0 0.0
        %1413 = vmatprep.subr.mxu0 0.0
        %1414 = vmatpush1.msra.mxu0 0.0
        %1415 = vmatprep.subr.mxu0 0.0
        %1416 = vmatpush1.msra.mxu0 0.0
        %1417 = vmatprep.subr.mxu0 0.0
        %1418 = vmatpush1.msra.mxu0 0.0
        %1419 = vmatprep.subr.mxu0 0.0
        %1420 = vmatpush1.msra.mxu0 0.0
        %1421 = vmatprep.subr.mxu0 0.0
        %1422 = vmatpush1.msra.mxu0 0.0
        %1423 = vmatprep.subr.mxu0 0.0
        %1424 = vmatpush1.msra.mxu0 0.0
        %1425 = vmatprep.subr.mxu0 0.0
        %1426 = vmatpush1.msra.mxu0 0.0
        %1427 = vmatprep.subr.mxu0 0.0
        %1428 = vmatpush1.msra.mxu0 0.0
        %1429 = vmatprep.subr.mxu0 0.0
        %1430 = vmatpush1.msra.mxu0 0.0
        %1431 = vmatprep.subr.mxu0 0.0
        %1432 = vmatpush1.msra.mxu0 0.0
        %1433 = vmatprep.subr.mxu0 0.0
        %1434 = vmatpush1.msra.mxu0 0.0
        %1435 = vmatprep.subr.mxu0 0.0
        %1436 = vmatpush1.msra.mxu0 0.0
        %1437 = vmatprep.subr.mxu0 0.0
        %1438 = vmatpush1.msra.mxu0 0.0
        %1439 = vmatprep.subr.mxu0 0.0
        %1440 = vmatpush1.msra.mxu0 0.0
        %1441 = vmatprep.subr.mxu0 0.0
        %1442 = vmatpush1.msra.mxu0 0.0
        %1443 = vmatprep.mubr.f32.mxu0 0.0
        %1444 = vmatmul.mubr.f32.gmra.mrb[0].mxu0 %v1377
        %v1445 = vpop.f32.mrb[0].mxu0
        %v1446 = vadd.f32 0.0, %v1445
        %v1447 = vpop.f32.mrb[0].mxu0
        %1448 = vdwg.mxu0
        %v1449 = vlaneseq
        %v1450 = vshrl.u32 %v1449, 7
        %v1451 = vsub.s32 0, %v1450
        %v1452 = vrot.slane %v1446, %v1451
        %v1453 = vsub.f32 %v1294, %v1452
        %v1454 = vsub.f32 %v1295, %v1452
        %v1455 = vmul.f32 %v1453, %v1453
        %v1456 = vmul.f32 %v1454, %v1454
        %v1457 = vadd.f32 %v1455, %v1456
        %v1458 = vrot.slane %v1457, 4
        %v1459 = vadd.f32 %v1457, %v1458
        %v1460 = vrot.slane %v1459, 2
        %v1461 = vadd.f32 %v1459, %v1460
        %v1462 = vrot.slane %v1461, 1
        %v1463 = vadd.f32 %v1461, %v1462
        %1464 = vmatprep.subr.mxu0 0.0
        %1465 = vmatpush1.msra.mxu0 %v365
        %1466 = vmatprep.subr.mxu0 0.0
        %1467 = vmatpush1.msra.mxu0 %v366
        %1468 = vmatprep.subr.mxu0 0.0
        %1469 = vmatpush1.msra.mxu0 %v367
        %1470 = vmatprep.subr.mxu0 0.0
        %1471 = vmatpush1.msra.mxu0 %v368
        %1472 = vmatprep.subr.mxu0 0.0
        %1473 = vmatpush1.msra.mxu0 %v369
        %1474 = vmatprep.subr.mxu0 0.0
        %1475 = vmatpush1.msra.mxu0 %v370
        %1476 = vmatprep.subr.mxu0 0.0
        %1477 = vmatpush1.msra.mxu0 %v371
        %1478 = vmatprep.subr.mxu0 0.0
        %1479 = vmatpush1.msra.mxu0 %v372
        %1480 = vmatprep.subr.mxu0 0.0
        %1481 = vmatpush1.msra.mxu0 %v373
        %1482 = vmatprep.subr.mxu0 0.0
        %1483 = vmatpush1.msra.mxu0 %v374
        %1484 = vmatprep.subr.mxu0 0.0
        %1485 = vmatpush1.msra.mxu0 %v375
        %1486 = vmatprep.subr.mxu0 0.0
        %1487 = vmatpush1.msra.mxu0 %v376
        %1488 = vmatprep.subr.mxu0 0.0
        %1489 = vmatpush1.msra.mxu0 %v377
        %1490 = vmatprep.subr.mxu0 0.0
        %1491 = vmatpush1.msra.mxu0 %v378
        %1492 = vmatprep.subr.mxu0 0.0
        %1493 = vmatpush1.msra.mxu0 %v379
        %1494 = vmatprep.subr.mxu0 0.0
        %1495 = vmatpush1.msra.mxu0 %v380
        %1496 = vmatprep.subr.mxu0 0.0
        %1497 = vmatpush1.msra.mxu0 0.0
        %1498 = vmatprep.subr.mxu0 0.0
        %1499 = vmatpush1.msra.mxu0 0.0
        %1500 = vmatprep.subr.mxu0 0.0
        %1501 = vmatpush1.msra.mxu0 0.0
        %1502 = vmatprep.subr.mxu0 0.0
        %1503 = vmatpush1.msra.mxu0 0.0
        %1504 = vmatprep.subr.mxu0 0.0
        %1505 = vmatpush1.msra.mxu0 0.0
        %1506 = vmatprep.subr.mxu0 0.0
        %1507 = vmatpush1.msra.mxu0 0.0
        %1508 = vmatprep.subr.mxu0 0.0
        %1509 = vmatpush1.msra.mxu0 0.0
        %1510 = vmatprep.subr.mxu0 0.0
        %1511 = vmatpush1.msra.mxu0 0.0
        %1512 = vmatprep.subr.mxu0 0.0
        %1513 = vmatpush1.msra.mxu0 0.0
        %1514 = vmatprep.subr.mxu0 0.0
        %1515 = vmatpush1.msra.mxu0 0.0
        %1516 = vmatprep.subr.mxu0 0.0
        %1517 = vmatpush1.msra.mxu0 0.0
        %1518 = vmatprep.subr.mxu0 0.0
        %1519 = vmatpush1.msra.mxu0 0.0
        %1520 = vmatprep.subr.mxu0 0.0
        %1521 = vmatpush1.msra.mxu0 0.0
        %1522 = vmatprep.subr.mxu0 0.0
        %1523 = vmatpush1.msra.mxu0 0.0
        %1524 = vmatprep.subr.mxu0 0.0
        %1525 = vmatpush1.msra.mxu0 0.0
        %1526 = vmatprep.subr.mxu0 0.0
        %1527 = vmatpush1.msra.mxu0 0.0
        %1528 = vmatprep.mubr.f32.mxu0 0.0
        %1529 = vmatmul.mubr.f32.gmra.mrb[0].mxu0 %v1463
        %v1530 = vpop.f32.mrb[0].mxu0
        %v1531 = vadd.f32 0.0, %v1530
        %v1532 = vpop.f32.mrb[0].mxu0
        %1533 = vdwg.mxu0
        %v1534 = vmul.f32 %v1531, %v746
        %v1535 = vadd.f32 %v1534, 1e-05
        %v1536 = vrsqrt.pop %v1535
        %v1538 = vsel %vm748, %v1536, 0
        %1540 = vmatprep.subr.mxu0 0.0
        %1541 = vmatpush1.msra.mxu0 %v754
        %1542 = vmatprep.subr.mxu0 0.0
        %1543 = vmatpush1.msra.mxu0 0.0
        %1544 = vmatprep.subr.mxu0 0.0
        %1545 = vmatpush1.msra.mxu0 0.0
        %1546 = vmatprep.subr.mxu0 0.0
        %1547 = vmatpush1.msra.mxu0 0.0
        %1548 = vmatprep.subr.mxu0 0.0
        %1549 = vmatpush1.msra.mxu0 0.0
        %1550 = vmatprep.subr.mxu0 0.0
        %1551 = vmatpush1.msra.mxu0 0.0
        %1552 = vmatprep.subr.mxu0 0.0
        %1553 = vmatpush1.msra.mxu0 0.0
        %1554 = vmatprep.subr.mxu0 0.0
        %1555 = vmatpush1.msra.mxu0 0.0
        %1556 = vmatprep.subr.mxu0 0.0
        %1557 = vmatpush1.msra.mxu0 0.0
        %1558 = vmatprep.subr.mxu0 0.0
        %1559 = vmatpush1.msra.mxu0 0.0
        %1560 = vmatprep.subr.mxu0 0.0
        %1561 = vmatpush1.msra.mxu0 0.0
        %1562 = vmatprep.subr.mxu0 0.0
        %1563 = vmatpush1.msra.mxu0 0.0
        %1564 = vmatprep.subr.mxu0 0.0
        %1565 = vmatpush1.msra.mxu0 0.0
        %1566 = vmatprep.subr.mxu0 0.0
        %1567 = vmatpush1.msra.mxu0 0.0
        %1568 = vmatprep.subr.mxu0 0.0
        %1569 = vmatpush1.msra.mxu0 0.0
        %1570 = vmatprep.subr.mxu0 0.0
        %1571 = vmatpush1.msra.mxu0 0.0
        %1572 = vmatprep.subr.mxu0 0.0
        %1573 = vmatpush1.msra.mxu0 0.0
        %1574 = vmatprep.subr.mxu0 0.0
        %1575 = vmatpush1.msra.mxu0 0.0
        %1576 = vmatprep.subr.mxu0 0.0
        %1577 = vmatpush1.msra.mxu0 0.0
        %1578 = vmatprep.subr.mxu0 0.0
        %1579 = vmatpush1.msra.mxu0 0.0
        %1580 = vmatprep.subr.mxu0 0.0
        %1581 = vmatpush1.msra.mxu0 0.0
        %1582 = vmatprep.subr.mxu0 0.0
        %1583 = vmatpush1.msra.mxu0 0.0
        %1584 = vmatprep.subr.mxu0 0.0
        %1585 = vmatpush1.msra.mxu0 0.0
        %1586 = vmatprep.subr.mxu0 0.0
        %1587 = vmatpush1.msra.mxu0 0.0
        %1588 = vmatprep.subr.mxu0 0.0
        %1589 = vmatpush1.msra.mxu0 0.0
        %1590 = vmatprep.subr.mxu0 0.0
        %1591 = vmatpush1.msra.mxu0 0.0
        %1592 = vmatprep.subr.mxu0 0.0
        %1593 = vmatpush1.msra.mxu0 0.0
        %1594 = vmatprep.subr.mxu0 0.0
        %1595 = vmatpush1.msra.mxu0 0.0
        %1596 = vmatprep.subr.mxu0 0.0
        %1597 = vmatpush1.msra.mxu0 0.0
        %1598 = vmatprep.subr.mxu0 0.0
        %1599 = vmatpush1.msra.mxu0 0.0
        %1600 = vmatprep.subr.mxu0 0.0
        %1601 = vmatpush1.msra.mxu0 0.0
        %1602 = vmatprep.subr.mxu0 0.0
        %1603 = vmatpush1.msra.mxu0 0.0
        %1604 = vmatprep.mubr.f32.mxu0 0.0
        %1605 = vmatmul.mubr.f32.gmra.mrb[0].mxu0 %v1538
        %v1606 = vpop.f32.mrb[0].mxu0
        %v1607 = vadd.f32 0.0, %v1606
        %v1608 = vpop.f32.mrb[0].mxu0
        %1609 = vdwg.mxu0
        %v1610 = vlaneseq
        %v1611 = vshrl.u32 %v1610, 7
        %v1612 = vsub.s32 0, %v1611
        %v1613 = vrot.slane %v1607, %v1612
        %v1614 = vmul.f32 %v1453, %v1613
        %v1615 = vmul.f32 %v1454, %v1613
        %v1617 = vlaneseq
        %v1618 = vshrl.u32 %v1617, 7
        %v1619 = vsub.s32 0, %v1618
        %v1620 = vrot.slane %v1296, %v1619
        %v1622 = vmul.f32 %v1614, %v1620
        %v1623 = vmul.f32 %v1615, %v1620
        %v1625 = vlaneseq
        %v1626 = vshrl.u32 %v1625, 7
        %v1627 = vsub.s32 0, %v1626
        %v1628 = vrot.slane %v1297, %v1627
        %v1630 = vadd.f32 %v1622, %v1628
        %v1631 = vadd.f32 %v1623, %v1628
        %v1632 = vadd.f32 %v1630, %v361
        %v1633 = vadd.f32 %v1631, %v362
        %1634 = vst [vmem:[%s355] sm:$0xff] %v1632
        %1635 = vst [vmem:[%s355 + $0x8] sm:$0xff] %v1633
        %s1636 = sand.u32 %s227, 1
        %s1637 = scalar_lea.sflag [#allocation5], %s1636
        %s1638 = sand.u32 %s227, 1
        %s1639 = smul.addr %s1638, 16
        %s1640 = scalar_lea.vmem [#allocation8], %s1639
        // Predicated region
        $region65: #{tpu_custom_call.1} parent=55 // pred_check
          %p1641 = pneg %p237
        $region66: #{tpu_custom_call.1} parent=55 // pred_check_branch
          %1643 = sbr.rel (%p1641) target = $region68
        $region67: #{tpu_custom_call.1} parent=55 // pred_region
          %s1645 = ssub.s32 256, 256
          %1646 = vsyncadd %s1637, %s1645
          %s1647 = smul.addr %s25, 2
          %s1648 = smul.addr %s1647, 128
          %s1649 = scalar_lea.hbm %s9, %s1648
          %s1650 = sshll.u32 %s1640, 4
          %s1651 = int_to_ptr.vmem [resolvable:$true] %s1650
          %1656 = dma.vmem_to_hbm [thread:$0]  %s1651, 256, %s1649, %s1637, 128, 128, 8
        $region68: #{tpu_custom_call.1} parent=55 // pred_fallthru
          _
      $region56: #{tpu_custom_call.1} parent=5 // pred_fallthru
        _
      %p1657 = scmp.le.s32.totalorder 2, %s20
      // Predicated region
      $region69: #{tpu_custom_call.1} parent=5 // pred_check
        %p1658 = pneg %p1657
      $region70: #{tpu_custom_call.1} parent=5 // pred_check_branch
        %1660 = sbr.rel (%p1658) target = $region72
      $region71: #{tpu_custom_call.1} parent=5 // pred_region
        %s1661 = ssub.s32 %s20, 2
        // Predicated region
        $region73: #{tpu_custom_call.1} parent=71 // pred_check
          %p1662 = pneg %p243
        $region74: #{tpu_custom_call.1} parent=71 // pred_check_branch
          %1664 = sbr.rel (%p1662) target = $region76
        $region75: #{tpu_custom_call.1} parent=71 // pred_region
          %s1665 = sand.u32 %s228, 1
          %s1666 = scalar_lea.sflag [#allocation5], %s1665
          %s1667 = sand.u32 %s228, 1
          %s1668 = smul.addr %s1667, 16
          %s1669 = scalar_lea.vmem [#allocation8], %s1668
          %1670 = dma.done %s1666, 256
        $region76: #{tpu_custom_call.1} parent=71 // pred_fallthru
          _
      $region72: #{tpu_custom_call.1} parent=5 // pred_fallthru
        _
    $region6: #{tpu_custom_call.1} parent=1 // loop_footer
      %s24 = sadd.s32 1, %s20
    $region7: #{tpu_custom_call.1} parent=1 // loop_footer_branch
      %19 = sbr.rel target = $region3
    $region8: #{tpu_custom_call.1} parent=1 // loop_exit
      _
    %1671 = vsyncpa [#allocation4], 1
    %s1672 = scalar_lea.sflag [#allocation4], 1
    %1673 = vsyncpa %s1672, 1
    %1674 = vsyncpa [#allocation7], 1
    %1675 = vsyncpa [#allocation5], 1
    %s1676 = scalar_lea.sflag [#allocation5], 1
    %1677 = vsyncpa %s1676, 1

</llo_original>
